<compile_context>
chip_gen: v7x
topology: tpu7x:2x2x1
jax: 0.10.0
libtpu: 0.0.40
codegen_flags: <defaults>
</compile_context>

<pallas_src>
import functools
import math

import jax
import jax.numpy as jnp
from jax import lax
from jax.experimental import pallas as pl
from jax.experimental.pallas import tpu as pltpu

F_PAD = 128  # lane-dense feature width for every on-chip tensor


# ----------------------------- helpers -------------------------------------

def _round_up(x, m):
    return (x + m - 1) // m * m


def _pad_to(x, rows, cols):
    r, c = x.shape
    return jnp.pad(x, ((0, rows - r), (0, cols - c)))


# ----------------------------- fused kernel --------------------------------

def _make_kernel(*, n_pred, arity_max, hidden, num_layer, o_pad, a_pad, g_pad):
    H = hidden
    AM = arity_max
    BF = jnp.bfloat16
    IDX_ENC_OBJ, IDX_UPD, IDX_MSG0 = 0, 1, 2

    def kernel(x_obj_ref, gat_ref, sca_ref, batch_ref,
               w1_ref, b1_ref, w2_ref, b2_ref, out_ref):

        def mlp(x, k):
            # pyg.nn.MLP([in, hid, out], norm=None): Linear -> ReLU -> Linear.
            # bf16 operands on the MXU, f32 accumulate / elementwise.
            h = jnp.dot(x.astype(BF), w1_ref[k],
                        preferred_element_type=jnp.float32) + b1_ref[k]
            h = jnp.maximum(h, 0.0)
            return jnp.dot(h.astype(BF), w2_ref[k],
                           preferred_element_type=jnp.float32) + b2_ref[k]

        # ---- lane-index iotas (hoisted, VPU masks) --------------------------
        lane_o = lax.broadcasted_iota(jnp.int32, (o_pad, F_PAD), 1)
        lane_a = lax.broadcasted_iota(jnp.int32, (a_pad, F_PAD), 1)

        def keep_head(x, lane):          # zero out lanes >= H (explicit mask)
            return jnp.where(lane < H, x, 0.0)

        # ---- gather / scatter / pool one-hots (bf16, built once) ------------
        # gat_ref[p][a, s*o_pad + o] == s*o_pad + o  iff atom a of predicate p
        # has object o in slot s (offset-encoded in the wrapper, -1 = padding).
        k_iota = lax.broadcasted_iota(jnp.int32, (a_pad, AM * o_pad), 1)
        o_iota = lax.broadcasted_iota(jnp.int32, (o_pad, AM * a_pad), 0)
        gathers = [(gat_ref[p] == k_iota).astype(jnp.float32).astype(BF)
                   for p in range(n_pred)]            # (a_pad, AM*o_pad)
        scatters = [(sca_ref[p] == o_iota).astype(jnp.float32).astype(BF)
                    for p in range(n_pred)]           # (o_pad, AM*a_pad)
        g_iota = lax.broadcasted_iota(jnp.int32, (g_pad, o_pad), 0)
        pool = (batch_ref[...] == g_iota).astype(jnp.float32).astype(BF)

        # ---- object encoding (atom encoders are dead in the reference) ------
        obj = mlp(x_obj_ref[...], IDX_ENC_OBJ)        # (o_pad, 128) f32

        # ---- message-passing layers (trace-time unrolled, VMEM resident) ----
        for _ in range(num_layer):
            # Slot-placed object table: block s holds obj[:, :H] at lanes
            # [s*H, (s+1)*H).  roll = XLU lane rotation, mask = VPU select.
            obj_m = keep_head(obj, lane_o)
            placed = [obj_m if s == 0 else
                      pltpu.roll(obj_m, shift=s * H, axis=1)
                      for s in range(AM)]
            obj_stack = jnp.concatenate(placed, axis=0).astype(BF)  # (AM*o_pad,128)

            msg = None
            for p in range(n_pred):
                # FanOutMP: batched gather-"concat" -> single K=AM*o_pad matmul.
                cat_in = jnp.dot(gathers[p], obj_stack,
                                 preferred_element_type=jnp.float32)  # (a_pad,128)
                atom_p = mlp(cat_in, IDX_MSG0 + p)                    # (a_pad,128)
                # FanInMP (aggr='sum'): slot-s chunk moved to lanes [:H],
                # stacked along the contraction axis -> single scatter matmul.
                chunks = [keep_head(atom_p if s == 0 else
                                    pltpu.roll(atom_p,
                                               shift=(F_PAD - s * H) % F_PAD,
                                               axis=1),
                                    lane_a)
                          for s in range(AM)]
                y = jnp.concatenate(chunks, axis=0).astype(BF)        # (AM*a_pad,128)
                contrib = jnp.dot(scatters[p], y,
                                  preferred_element_type=jnp.float32)  # (o_pad,128)
                msg = contrib if msg is None else msg + contrib
            if msg is None:
                msg = jnp.zeros((o_pad, F_PAD), jnp.float32)

            # obj_update on cat([obj, msg], dim=1): msg rolled to lanes [H, 2H).
            msg_m = keep_head(msg, lane_o)
            cat_obj = obj_m + pltpu.roll(msg_m, shift=H, axis=1)
            obj = mlp(cat_obj, IDX_UPD)

        # ---- global_add_pool (lane-dense (g_pad, 128) f32 store) ------------
        out_ref[...] = jnp.dot(pool, obj.astype(BF),
                               preferred_element_type=jnp.float32)

    return kernel


# ----------------------------- forward wrapper ------------------------------

def hetero_gnn_forward(params, x_dict, edge_index_dict, batch, num_graphs,
                       hidden_size, num_layer, arity_dict, obj_type_id="obj"):
    H = hidden_size
    preds = [p for p, a in arity_dict.items() if a > 0 and p in edge_index_dict]
    n_pred = len(preds)
    am = max([arity_dict[p] for p in preds], default=1)

    max_feat = max([x_dict[obj_type_id].shape[1], 2 * H]
                   + [arity_dict[p] * H for p in preds])
    assert max_feat <= F_PAD, "feature widths must fit one 128-lane tile"

    n_obj = x_dict[obj_type_id].shape[0]
    o_pad = _round_up(n_obj, 8)
    a_max = max([edge_index_dict[p].shape[1] for p in preds], default=1)
    a_pad = _round_up(a_max, 8)
    g_pad = _round_up(num_graphs, 8)

    # -- object features: lane dim padded to 128, rows to multiple of 8 --------
    x_obj = _pad_to(x_dict[obj_type_id].astype(jnp.float32), o_pad, F_PAD)

    # -- integer index tensors (tiny int32) -------------------------------------
    # e_full[p, s, a] = object index in slot s of atom a of predicate p, -1 pad.
    e_full = jnp.full((n_pred, am, a_pad), -1, jnp.int32)
    for i, p in enumerate(preds):
        e = edge_index_dict[p].astype(jnp.int32)          # (arity_p, n_atoms_p)
        e_full = e_full.at[i, :e.shape[0], :e.shape[1]].set(e)
    # Gather index, offset-encoded so the kernel compares against a plain lane
    # iota (no // or %):  gat[p, a, s*o_pad + o] = e_full[p, s, a] + s*o_pad.
    offs = (jnp.arange(am, dtype=jnp.int32) * o_pad)[None, :, None]
    e_off = jnp.where(e_full >= 0, e_full + offs, -1)
    gat = jnp.repeat(jnp.transpose(e_off, (0, 2, 1)), o_pad, axis=-1)
    # Scatter index: sca[p, 0, s*a_pad + a] = e_full[p, s, a].
    sca = e_full.reshape(n_pred, 1, am * a_pad)

    batch_row = jnp.full((1, o_pad), -1, jnp.int32)
    batch_row = batch_row.at[0, :n_obj].set(batch.astype(jnp.int32))

    # -- MLP weights zero-padded to (128, 128) slabs, stacked as bf16 -----------
    # order: [enc_obj, obj_update, msg_pred[p0..]]  (atom encoders are dead).
    mlps = ([params["enc_obj"], params["obj_update"]]
            + [params["msg_pred"][p] for p in preds])
    W1 = jnp.stack([_pad_to(m["w1"], F_PAD, F_PAD) for m in mlps]).astype(jnp.bfloat16)
    W2 = jnp.stack([_pad_to(m["w2"], F_PAD, F_PAD) for m in mlps]).astype(jnp.bfloat16)
    # Biases only feed f32 VPU adds (kept f32 for v5e's f32-only VPU; DMA is nil).
    B1 = jnp.stack([_pad_to(m["b1"].reshape(1, -1), 1, F_PAD) for m in mlps])
    B2 = jnp.stack([_pad_to(m["b2"].reshape(1, -1), 1, F_PAD) for m in mlps])

    kernel = _make_kernel(n_pred=n_pred, arity_max=am, hidden=H,
                          num_layer=num_layer, o_pad=o_pad, a_pad=a_pad,
                          g_pad=g_pad)

    # Single-program call: everything fits comfortably in VMEM at these sizes.
    out = pl.pallas_call(
        kernel,
        out_shape=jax.ShapeDtypeStruct((g_pad, F_PAD), jnp.float32),
    )(x_obj, gat, sca, batch_row, W1, B1, W2, B2)
    return out[:num_graphs, :H]


# ----------------------------- pure-JAX reference ---------------------------

def hetero_gnn_reference(params, x_dict, edge_index_dict, batch, num_graphs,
                         hidden_size, num_layer, arity_dict, obj_type_id="obj"):
    hp = jax.lax.Precision.HIGHEST

    def mlp(x, m):
        h = jnp.maximum(jnp.dot(x, m["w1"], precision=hp) + m["b1"], 0.0)
        return jnp.dot(h, m["w2"], precision=hp) + m["b2"]

    h = {obj_type_id: mlp(x_dict[obj_type_id], params["enc_obj"])}
    for pred, arity in arity_dict.items():
        if arity > 0 and pred in x_dict:
            h[pred] = mlp(x_dict[pred], params["enc_pred"][pred])
    n_obj = h[obj_type_id].shape[0]
    for _ in range(num_layer):
        obj_emb = h[obj_type_id]
        for pred, arity in arity_dict.items():
            if arity == 0 or pred not in edge_index_dict:
                continue
            idx = edge_index_dict[pred]
            gathered = jnp.concatenate([obj_emb[idx[i]] for i in range(arity)], axis=1)
            h[pred] = mlp(gathered, params["msg_pred"][pred])
        msg = jnp.zeros((n_obj, hidden_size), jnp.float32)
        for pred, arity in arity_dict.items():
            if arity == 0 or pred not in edge_index_dict:
                continue
            idx = edge_index_dict[pred]
            for i in range(arity):
                chunk = h[pred][:, i * hidden_size:(i + 1) * hidden_size]
                msg = msg + jax.ops.segment_sum(chunk, idx[i], num_segments=n_obj)
        h[obj_type_id] = mlp(jnp.concatenate([obj_emb, msg], axis=1),
                             params["obj_update"])
    return jax.ops.segment_sum(h[obj_type_id], batch, num_segments=num_graphs)


# ----------------------------- parameters ----------------------------------

def init_linear(key, fan_in, fan_out):
    kw, kb = jax.random.split(key)
    bound = 1.0 / math.sqrt(fan_in)
    w = jax.random.uniform(kw, (fan_in, fan_out), jnp.float32, -bound, bound)
    b = jax.random.uniform(kb, (fan_out,), jnp.float32, -bound, bound)
    return w, b


def init_mlp(key, in_size, hidden_size, out_size):
    k1, k2 = jax.random.split(key)
    w1, b1 = init_linear(k1, in_size, hidden_size)
    w2, b2 = init_linear(k2, hidden_size, out_size)
    return {"w1": w1, "b1": b1, "w2": w2, "b2": b2}


def init_hetero_gnn(key, hidden_size, arity_dict, input_size):
    n_pred = len(arity_dict)
    keys = jax.random.split(key, 2 + 2 * n_pred)
    params = {
        "enc_obj": init_mlp(keys[0], input_size, hidden_size, hidden_size),
        "obj_update": init_mlp(keys[1], 2 * hidden_size, 2 * hidden_size, hidden_size),
        "enc_pred": {},
        "msg_pred": {},
    }
    i = 2
    for pred, arity in arity_dict.items():
        if arity > 0:
            params["enc_pred"][pred] = init_mlp(
                keys[i], input_size * arity, hidden_size * arity, hidden_size * arity)
            params["msg_pred"][pred] = init_mlp(
                keys[i + 1], hidden_size * arity, hidden_size * arity, hidden_size * arity)
        i += 2
    return params


# ----------------------------- main ------------------------------------------

if __name__ == "__main__":
    hidden_size = 32
    num_layer = 2
    input_size = 7
    obj_type_id = "obj"
    arity_dict = {"on": 2, "clear": 1, "goal_on": 2}

    n_obj = 10
    n_atoms = {"on": 6, "clear": 4, "goal_on": 3}
    num_graphs = 2

    key = jax.random.PRNGKey(0)
    (k_param, k_obj, k_on, k_clear, k_goal,
     k_e1, k_e2, k_e3) = jax.random.split(key, 8)

    params = init_hetero_gnn(k_param, hidden_size, arity_dict, input_size)

    x_dict = {
        obj_type_id: jax.random.normal(k_obj, (n_obj, input_size), jnp.float32),
        "on": jax.random.normal(k_on, (n_atoms["on"], input_size * 2), jnp.float32),
        "clear": jax.random.normal(k_clear, (n_atoms["clear"], input_size * 1), jnp.float32),
        "goal_on": jax.random.normal(k_goal, (n_atoms["goal_on"], input_size * 2), jnp.float32),
    }
    edge_index_dict = {
        "on": jax.random.randint(k_e1, (2, n_atoms["on"]), 0, n_obj, dtype=jnp.int32),
        "clear": jax.random.randint(k_e2, (1, n_atoms["clear"]), 0, n_obj, dtype=jnp.int32),
        "goal_on": jax.random.randint(k_e3, (2, n_atoms["goal_on"]), 0, n_obj, dtype=jnp.int32),
    }
    batch = jnp.concatenate(
        [jnp.zeros((6,), jnp.int32), jnp.ones((4,), jnp.int32)])

    fwd = jax.jit(functools.partial(
        hetero_gnn_forward, num_graphs=num_graphs, hidden_size=hidden_size,
        num_layer=num_layer, arity_dict=arity_dict, obj_type_id=obj_type_id))

    out = jax.block_until_ready(fwd(params, x_dict, edge_index_dict, batch))

    ref = jax.block_until_ready(hetero_gnn_reference(
        params, x_dict, edge_index_dict, batch, num_graphs,
        hidden_size, num_layer, arity_dict, obj_type_id))

    assert out.shape == (num_graphs, hidden_size)
    assert jnp.all(jnp.isfinite(out))
    # bf16 MXU operands vs f32-HIGHEST reference: allow bf16-level tolerance.
    assert jnp.allclose(out, ref, rtol=1e-1, atol=2e-2), \
        f"max abs diff {float(jnp.max(jnp.abs(out - ref)))}"
    print("KERNEL_OK")
</pallas_src>

<mosaic_0001>
module attributes {stable_mosaic.version = 11 : i64} {
  func.func @kernel(%arg0: memref<16x128xf32, #tpu.memory_space<vmem>>, %arg1: memref<3x8x32xi32, #tpu.memory_space<vmem>>, %arg2: memref<3x1x16xi32, #tpu.memory_space<vmem>>, %arg3: memref<1x16xi32, #tpu.memory_space<vmem>>, %arg4: memref<5x128x128xbf16, #tpu.memory_space<vmem>>, %arg5: memref<5x1x128xf32, #tpu.memory_space<vmem>>, %arg6: memref<5x128x128xbf16, #tpu.memory_space<vmem>>, %arg7: memref<5x1x128xf32, #tpu.memory_space<vmem>>, %arg8: memref<8x128xf32, #tpu.memory_space<vmem>>) attributes {dimension_semantics = [], scalar_prefetch = 0 : i64, scratch_operands = 0 : i64, tpu.core_type = #tpu.core_type<tc>} {
    %0 = tpu.iota {dimensions = array<i32: 1>} : vector<16x128xi32>
    %1 = tpu.iota {dimensions = array<i32: 1>} : vector<8x128xi32>
    %2 = tpu.iota {dimensions = array<i32: 1>} : vector<8x32xi32>
    %3 = tpu.iota {dimensions = array<i32: 0>} : vector<16x16xi32>
    %c0 = arith.constant 0 : index
    %c0_0 = arith.constant 0 : index
    %c0_1 = arith.constant 0 : index
    %4 = vector.load %arg1[%c0, %c0_0, %c0_1] : memref<3x8x32xi32, #tpu.memory_space<vmem>>, vector<1x8x32xi32>
    %5 = vector.shape_cast %4 : vector<1x8x32xi32> to vector<8x32xi32>
    %6 = arith.cmpi eq, %5, %2 : vector<8x32xi32>
    %7 = arith.extui %6 : vector<8x32xi1> to vector<8x32xi32>
    %8 = arith.sitofp %7 : vector<8x32xi32> to vector<8x32xf32>
    %9 = arith.truncf %8 : vector<8x32xf32> to vector<8x32xbf16>
    %c1 = arith.constant 1 : index
    %c0_2 = arith.constant 0 : index
    %c0_3 = arith.constant 0 : index
    %10 = vector.load %arg1[%c1, %c0_2, %c0_3] : memref<3x8x32xi32, #tpu.memory_space<vmem>>, vector<1x8x32xi32>
    %11 = vector.shape_cast %10 : vector<1x8x32xi32> to vector<8x32xi32>
    %12 = arith.cmpi eq, %11, %2 : vector<8x32xi32>
    %13 = arith.extui %12 : vector<8x32xi1> to vector<8x32xi32>
    %14 = arith.sitofp %13 : vector<8x32xi32> to vector<8x32xf32>
    %15 = arith.truncf %14 : vector<8x32xf32> to vector<8x32xbf16>
    %c2 = arith.constant 2 : index
    %c0_4 = arith.constant 0 : index
    %c0_5 = arith.constant 0 : index
    %16 = vector.load %arg1[%c2, %c0_4, %c0_5] : memref<3x8x32xi32, #tpu.memory_space<vmem>>, vector<1x8x32xi32>
    %17 = vector.shape_cast %16 : vector<1x8x32xi32> to vector<8x32xi32>
    %18 = arith.cmpi eq, %17, %2 : vector<8x32xi32>
    %19 = arith.extui %18 : vector<8x32xi1> to vector<8x32xi32>
    %20 = arith.sitofp %19 : vector<8x32xi32> to vector<8x32xf32>
    %21 = arith.truncf %20 : vector<8x32xf32> to vector<8x32xbf16>
    %c0_6 = arith.constant 0 : index
    %c0_7 = arith.constant 0 : index
    %c0_8 = arith.constant 0 : index
    %22 = vector.load %arg2[%c0_6, %c0_7, %c0_8] : memref<3x1x16xi32, #tpu.memory_space<vmem>>, vector<1x1x16xi32>
    %23 = vector.shape_cast %22 : vector<1x1x16xi32> to vector<1x16xi32>
    %24 = vector.broadcast %23 : vector<1x16xi32> to vector<16x16xi32>
    %25 = arith.cmpi eq, %24, %3 : vector<16x16xi32>
    %26 = arith.extui %25 : vector<16x16xi1> to vector<16x16xi32>
    %27 = arith.sitofp %26 : vector<16x16xi32> to vector<16x16xf32>
    %28 = arith.truncf %27 : vector<16x16xf32> to vector<16x16xbf16>
    %c1_9 = arith.constant 1 : index
    %c0_10 = arith.constant 0 : index
    %c0_11 = arith.constant 0 : index
    %29 = vector.load %arg2[%c1_9, %c0_10, %c0_11] : memref<3x1x16xi32, #tpu.memory_space<vmem>>, vector<1x1x16xi32>
    %30 = vector.shape_cast %29 : vector<1x1x16xi32> to vector<1x16xi32>
    %31 = vector.broadcast %30 : vector<1x16xi32> to vector<16x16xi32>
    %32 = arith.cmpi eq, %31, %3 : vector<16x16xi32>
    %33 = arith.extui %32 : vector<16x16xi1> to vector<16x16xi32>
    %34 = arith.sitofp %33 : vector<16x16xi32> to vector<16x16xf32>
    %35 = arith.truncf %34 : vector<16x16xf32> to vector<16x16xbf16>
    %c2_12 = arith.constant 2 : index
    %c0_13 = arith.constant 0 : index
    %c0_14 = arith.constant 0 : index
    %36 = vector.load %arg2[%c2_12, %c0_13, %c0_14] : memref<3x1x16xi32, #tpu.memory_space<vmem>>, vector<1x1x16xi32>
    %37 = vector.shape_cast %36 : vector<1x1x16xi32> to vector<1x16xi32>
    %38 = vector.broadcast %37 : vector<1x16xi32> to vector<16x16xi32>
    %39 = arith.cmpi eq, %38, %3 : vector<16x16xi32>
    %40 = arith.extui %39 : vector<16x16xi1> to vector<16x16xi32>
    %41 = arith.sitofp %40 : vector<16x16xi32> to vector<16x16xf32>
    %42 = arith.truncf %41 : vector<16x16xf32> to vector<16x16xbf16>
    %43 = tpu.iota {dimensions = array<i32: 0>} : vector<8x16xi32>
    %c0_15 = arith.constant 0 : index
    %c0_16 = arith.constant 0 : index
    %44 = vector.load %arg3[%c0_15, %c0_16] : memref<1x16xi32, #tpu.memory_space<vmem>>, vector<1x16xi32>
    %45 = vector.broadcast %44 : vector<1x16xi32> to vector<8x16xi32>
    %46 = arith.cmpi eq, %45, %43 : vector<8x16xi32>
    %47 = arith.extui %46 : vector<8x16xi1> to vector<8x16xi32>
    %48 = arith.sitofp %47 : vector<8x16xi32> to vector<8x16xf32>
    %49 = arith.truncf %48 : vector<8x16xf32> to vector<8x16xbf16>
    %c0_17 = arith.constant 0 : index
    %c0_18 = arith.constant 0 : index
    %50 = vector.load %arg0[%c0_17, %c0_18] : memref<16x128xf32, #tpu.memory_space<vmem>>, vector<16x128xf32>
    %51 = arith.truncf %50 : vector<16x128xf32> to vector<16x128xbf16>
    %c0_19 = arith.constant 0 : index
    %c0_20 = arith.constant 0 : index
    %c0_21 = arith.constant 0 : index
    %52 = vector.load %arg4[%c0_19, %c0_20, %c0_21] : memref<5x128x128xbf16, #tpu.memory_space<vmem>>, vector<1x128x128xbf16>
    %53 = vector.shape_cast %52 : vector<1x128x128xbf16> to vector<128x128xbf16>
    %cst = arith.constant dense<0.000000e+00> : vector<16x128xf32>
    %54 = tpu.matmul %51, %53, %cst {dimension_numbers = #tpu.dot_dimension_numbers<[1], [0], [0], [1], [0, 0, 1, 1], [], []>} : vector<16x128xbf16>, vector<128x128xbf16>, vector<16x128xf32> -> vector<16x128xf32>
    %c0_22 = arith.constant 0 : index
    %c0_23 = arith.constant 0 : index
    %c0_24 = arith.constant 0 : index
    %55 = vector.load %arg5[%c0_22, %c0_23, %c0_24] : memref<5x1x128xf32, #tpu.memory_space<vmem>>, vector<1x1x128xf32>
    %56 = vector.shape_cast %55 : vector<1x1x128xf32> to vector<1x128xf32>
    %57 = vector.broadcast %56 : vector<1x128xf32> to vector<16x128xf32>
    %58 = arith.addf %54, %57 : vector<16x128xf32>
    %cst_25 = arith.constant 0.000000e+00 : f32
    %59 = vector.broadcast %cst_25 : f32 to vector<16x128xf32>
    %60 = arith.maximumf %58, %59 : vector<16x128xf32>
    %61 = arith.truncf %60 : vector<16x128xf32> to vector<16x128xbf16>
    %c0_26 = arith.constant 0 : index
    %c0_27 = arith.constant 0 : index
    %c0_28 = arith.constant 0 : index
    %62 = vector.load %arg6[%c0_26, %c0_27, %c0_28] : memref<5x128x128xbf16, #tpu.memory_space<vmem>>, vector<1x128x128xbf16>
    %63 = vector.shape_cast %62 : vector<1x128x128xbf16> to vector<128x128xbf16>
    %cst_29 = arith.constant dense<0.000000e+00> : vector<16x128xf32>
    %64 = tpu.matmul %61, %63, %cst_29 {dimension_numbers = #tpu.dot_dimension_numbers<[1], [0], [0], [1], [0, 0, 1, 1], [], []>} : vector<16x128xbf16>, vector<128x128xbf16>, vector<16x128xf32> -> vector<16x128xf32>
    %c0_30 = arith.constant 0 : index
    %c0_31 = arith.constant 0 : index
    %c0_32 = arith.constant 0 : index
    %65 = vector.load %arg7[%c0_30, %c0_31, %c0_32] : memref<5x1x128xf32, #tpu.memory_space<vmem>>, vector<1x1x128xf32>
    %66 = vector.shape_cast %65 : vector<1x1x128xf32> to vector<1x128xf32>
    %67 = vector.broadcast %66 : vector<1x128xf32> to vector<16x128xf32>
    %68 = arith.addf %64, %67 : vector<16x128xf32>
    %c32_i32 = arith.constant 32 : i32
    %69 = vector.broadcast %c32_i32 : i32 to vector<16x128xi32>
    %70 = arith.cmpi slt, %0, %69 : vector<16x128xi32>
    %cst_33 = arith.constant 0.000000e+00 : f32
    %71 = vector.broadcast %cst_33 : f32 to vector<16x128xf32>
    %72 = arith.select %70, %68, %71 : vector<16x128xi1>, vector<16x128xf32>
    %c32_i32_34 = arith.constant 32 : i32
    %73 = tpu.dynamic_rotate %72 by %c32_i32_34 dim 1 : vector<16x128xf32>, i32 -> vector<16x128xf32>
    %74 = tpu.concatenate %72, %73 in 0 : vector<16x128xf32>, vector<16x128xf32> -> vector<32x128xf32>
    %75 = arith.truncf %74 : vector<32x128xf32> to vector<32x128xbf16>
    %cst_35 = arith.constant dense<0.000000e+00> : vector<8x128xf32>
    %76 = tpu.matmul %9, %75, %cst_35 {dimension_numbers = #tpu.dot_dimension_numbers<[1], [0], [0], [1], [0, 0, 1, 1], [], []>} : vector<8x32xbf16>, vector<32x128xbf16>, vector<8x128xf32> -> vector<8x128xf32>
    %77 = arith.truncf %76 : vector<8x128xf32> to vector<8x128xbf16>
    %c2_36 = arith.constant 2 : index
    %c0_37 = arith.constant 0 : index
    %c0_38 = arith.constant 0 : index
    %78 = vector.load %arg4[%c2_36, %c0_37, %c0_38] : memref<5x128x128xbf16, #tpu.memory_space<vmem>>, vector<1x128x128xbf16>
    %79 = vector.shape_cast %78 : vector<1x128x128xbf16> to vector<128x128xbf16>
    %cst_39 = arith.constant dense<0.000000e+00> : vector<8x128xf32>
    %80 = tpu.matmul %77, %79, %cst_39 {dimension_numbers = #tpu.dot_dimension_numbers<[1], [0], [0], [1], [0, 0, 1, 1], [], []>} : vector<8x128xbf16>, vector<128x128xbf16>, vector<8x128xf32> -> vector<8x128xf32>
    %c2_40 = arith.constant 2 : index
    %c0_41 = arith.constant 0 : index
    %c0_42 = arith.constant 0 : index
    %81 = vector.load %arg5[%c2_40, %c0_41, %c0_42] : memref<5x1x128xf32, #tpu.memory_space<vmem>>, vector<1x1x128xf32>
    %82 = vector.shape_cast %81 : vector<1x1x128xf32> to vector<1x128xf32>
    %83 = vector.broadcast %82 : vector<1x128xf32> to vector<8x128xf32>
    %84 = arith.addf %80, %83 : vector<8x128xf32>
    %cst_43 = arith.constant 0.000000e+00 : f32
    %85 = vector.broadcast %cst_43 : f32 to vector<8x128xf32>
    %86 = arith.maximumf %84, %85 : vector<8x128xf32>
    %87 = arith.truncf %86 : vector<8x128xf32> to vector<8x128xbf16>
    %c2_44 = arith.constant 2 : index
    %c0_45 = arith.constant 0 : index
    %c0_46 = arith.constant 0 : index
    %88 = vector.load %arg6[%c2_44, %c0_45, %c0_46] : memref<5x128x128xbf16, #tpu.memory_space<vmem>>, vector<1x128x128xbf16>
    %89 = vector.shape_cast %88 : vector<1x128x128xbf16> to vector<128x128xbf16>
    %cst_47 = arith.constant dense<0.000000e+00> : vector<8x128xf32>
    %90 = tpu.matmul %87, %89, %cst_47 {dimension_numbers = #tpu.dot_dimension_numbers<[1], [0], [0], [1], [0, 0, 1, 1], [], []>} : vector<8x128xbf16>, vector<128x128xbf16>, vector<8x128xf32> -> vector<8x128xf32>
    %c2_48 = arith.constant 2 : index
    %c0_49 = arith.constant 0 : index
    %c0_50 = arith.constant 0 : index
    %91 = vector.load %arg7[%c2_48, %c0_49, %c0_50] : memref<5x1x128xf32, #tpu.memory_space<vmem>>, vector<1x1x128xf32>
    %92 = vector.shape_cast %91 : vector<1x1x128xf32> to vector<1x128xf32>
    %93 = vector.broadcast %92 : vector<1x128xf32> to vector<8x128xf32>
    %94 = arith.addf %90, %93 : vector<8x128xf32>
    %c32_i32_51 = arith.constant 32 : i32
    %95 = vector.broadcast %c32_i32_51 : i32 to vector<8x128xi32>
    %96 = arith.cmpi slt, %1, %95 : vector<8x128xi32>
    %cst_52 = arith.constant 0.000000e+00 : f32
    %97 = vector.broadcast %cst_52 : f32 to vector<8x128xf32>
    %98 = arith.select %96, %94, %97 : vector<8x128xi1>, vector<8x128xf32>
    %c96_i32 = arith.constant 96 : i32
    %99 = tpu.dynamic_rotate %94 by %c96_i32 dim 1 : vector<8x128xf32>, i32 -> vector<8x128xf32>
    %c32_i32_53 = arith.constant 32 : i32
    %100 = vector.broadcast %c32_i32_53 : i32 to vector<8x128xi32>
    %101 = arith.cmpi slt, %1, %100 : vector<8x128xi32>
    %cst_54 = arith.constant 0.000000e+00 : f32
    %102 = vector.broadcast %cst_54 : f32 to vector<8x128xf32>
    %103 = arith.select %101, %99, %102 : vector<8x128xi1>, vector<8x128xf32>
    %104 = tpu.concatenate %98, %103 in 0 : vector<8x128xf32>, vector<8x128xf32> -> vector<16x128xf32>
    %105 = arith.truncf %104 : vector<16x128xf32> to vector<16x128xbf16>
    %cst_55 = arith.constant dense<0.000000e+00> : vector<16x128xf32>
    %106 = tpu.matmul %28, %105, %cst_55 {dimension_numbers = #tpu.dot_dimension_numbers<[1], [0], [0], [1], [0, 0, 1, 1], [], []>} : vector<16x16xbf16>, vector<16x128xbf16>, vector<16x128xf32> -> vector<16x128xf32>
    %cst_56 = arith.constant dense<0.000000e+00> : vector<8x128xf32>
    %107 = tpu.matmul %15, %75, %cst_56 {dimension_numbers = #tpu.dot_dimension_numbers<[1], [0], [0], [1], [0, 0, 1, 1], [], []>} : vector<8x32xbf16>, vector<32x128xbf16>, vector<8x128xf32> -> vector<8x128xf32>
    %108 = arith.truncf %107 : vector<8x128xf32> to vector<8x128xbf16>
    %c3 = arith.constant 3 : index
    %c0_57 = arith.constant 0 : index
    %c0_58 = arith.constant 0 : index
    %109 = vector.load %arg4[%c3, %c0_57, %c0_58] : memref<5x128x128xbf16, #tpu.memory_space<vmem>>, vector<1x128x128xbf16>
    %110 = vector.shape_cast %109 : vector<1x128x128xbf16> to vector<128x128xbf16>
    %cst_59 = arith.constant dense<0.000000e+00> : vector<8x128xf32>
    %111 = tpu.matmul %108, %110, %cst_59 {dimension_numbers = #tpu.dot_dimension_numbers<[1], [0], [0], [1], [0, 0, 1, 1], [], []>} : vector<8x128xbf16>, vector<128x128xbf16>, vector<8x128xf32> -> vector<8x128xf32>
    %c3_60 = arith.constant 3 : index
    %c0_61 = arith.constant 0 : index
    %c0_62 = arith.constant 0 : index
    %112 = vector.load %arg5[%c3_60, %c0_61, %c0_62] : memref<5x1x128xf32, #tpu.memory_space<vmem>>, vector<1x1x128xf32>
    %113 = vector.shape_cast %112 : vector<1x1x128xf32> to vector<1x128xf32>
    %114 = vector.broadcast %113 : vector<1x128xf32> to vector<8x128xf32>
    %115 = arith.addf %111, %114 : vector<8x128xf32>
    %cst_63 = arith.constant 0.000000e+00 : f32
    %116 = vector.broadcast %cst_63 : f32 to vector<8x128xf32>
    %117 = arith.maximumf %115, %116 : vector<8x128xf32>
    %118 = arith.truncf %117 : vector<8x128xf32> to vector<8x128xbf16>
    %c3_64 = arith.constant 3 : index
    %c0_65 = arith.constant 0 : index
    %c0_66 = arith.constant 0 : index
    %119 = vector.load %arg6[%c3_64, %c0_65, %c0_66] : memref<5x128x128xbf16, #tpu.memory_space<vmem>>, vector<1x128x128xbf16>
    %120 = vector.shape_cast %119 : vector<1x128x128xbf16> to vector<128x128xbf16>
    %cst_67 = arith.constant dense<0.000000e+00> : vector<8x128xf32>
    %121 = tpu.matmul %118, %120, %cst_67 {dimension_numbers = #tpu.dot_dimension_numbers<[1], [0], [0], [1], [0, 0, 1, 1], [], []>} : vector<8x128xbf16>, vector<128x128xbf16>, vector<8x128xf32> -> vector<8x128xf32>
    %c3_68 = arith.constant 3 : index
    %c0_69 = arith.constant 0 : index
    %c0_70 = arith.constant 0 : index
    %122 = vector.load %arg7[%c3_68, %c0_69, %c0_70] : memref<5x1x128xf32, #tpu.memory_space<vmem>>, vector<1x1x128xf32>
    %123 = vector.shape_cast %122 : vector<1x1x128xf32> to vector<1x128xf32>
    %124 = vector.broadcast %123 : vector<1x128xf32> to vector<8x128xf32>
    %125 = arith.addf %121, %124 : vector<8x128xf32>
    %c32_i32_71 = arith.constant 32 : i32
    %126 = vector.broadcast %c32_i32_71 : i32 to vector<8x128xi32>
    %127 = arith.cmpi slt, %1, %126 : vector<8x128xi32>
    %cst_72 = arith.constant 0.000000e+00 : f32
    %128 = vector.broadcast %cst_72 : f32 to vector<8x128xf32>
    %129 = arith.select %127, %125, %128 : vector<8x128xi1>, vector<8x128xf32>
    %c96_i32_73 = arith.constant 96 : i32
    %130 = tpu.dynamic_rotate %125 by %c96_i32_73 dim 1 : vector<8x128xf32>, i32 -> vector<8x128xf32>
    %c32_i32_74 = arith.constant 32 : i32
    %131 = vector.broadcast %c32_i32_74 : i32 to vector<8x128xi32>
    %132 = arith.cmpi slt, %1, %131 : vector<8x128xi32>
    %cst_75 = arith.constant 0.000000e+00 : f32
    %133 = vector.broadcast %cst_75 : f32 to vector<8x128xf32>
    %134 = arith.select %132, %130, %133 : vector<8x128xi1>, vector<8x128xf32>
    %135 = tpu.concatenate %129, %134 in 0 : vector<8x128xf32>, vector<8x128xf32> -> vector<16x128xf32>
    %136 = arith.truncf %135 : vector<16x128xf32> to vector<16x128xbf16>
    %cst_76 = arith.constant dense<0.000000e+00> : vector<16x128xf32>
    %137 = tpu.matmul %35, %136, %cst_76 {dimension_numbers = #tpu.dot_dimension_numbers<[1], [0], [0], [1], [0, 0, 1, 1], [], []>} : vector<16x16xbf16>, vector<16x128xbf16>, vector<16x128xf32> -> vector<16x128xf32>
    %138 = arith.addf %106, %137 : vector<16x128xf32>
    %cst_77 = arith.constant dense<0.000000e+00> : vector<8x128xf32>
    %139 = tpu.matmul %21, %75, %cst_77 {dimension_numbers = #tpu.dot_dimension_numbers<[1], [0], [0], [1], [0, 0, 1, 1], [], []>} : vector<8x32xbf16>, vector<32x128xbf16>, vector<8x128xf32> -> vector<8x128xf32>
    %140 = arith.truncf %139 : vector<8x128xf32> to vector<8x128xbf16>
    %c4 = arith.constant 4 : index
    %c0_78 = arith.constant 0 : index
    %c0_79 = arith.constant 0 : index
    %141 = vector.load %arg4[%c4, %c0_78, %c0_79] : memref<5x128x128xbf16, #tpu.memory_space<vmem>>, vector<1x128x128xbf16>
    %142 = vector.shape_cast %141 : vector<1x128x128xbf16> to vector<128x128xbf16>
    %cst_80 = arith.constant dense<0.000000e+00> : vector<8x128xf32>
    %143 = tpu.matmul %140, %142, %cst_80 {dimension_numbers = #tpu.dot_dimension_numbers<[1], [0], [0], [1], [0, 0, 1, 1], [], []>} : vector<8x128xbf16>, vector<128x128xbf16>, vector<8x128xf32> -> vector<8x128xf32>
    %c4_81 = arith.constant 4 : index
    %c0_82 = arith.constant 0 : index
    %c0_83 = arith.constant 0 : index
    %144 = vector.load %arg5[%c4_81, %c0_82, %c0_83] : memref<5x1x128xf32, #tpu.memory_space<vmem>>, vector<1x1x128xf32>
    %145 = vector.shape_cast %144 : vector<1x1x128xf32> to vector<1x128xf32>
    %146 = vector.broadcast %145 : vector<1x128xf32> to vector<8x128xf32>
    %147 = arith.addf %143, %146 : vector<8x128xf32>
    %cst_84 = arith.constant 0.000000e+00 : f32
    %148 = vector.broadcast %cst_84 : f32 to vector<8x128xf32>
    %149 = arith.maximumf %147, %148 : vector<8x128xf32>
    %150 = arith.truncf %149 : vector<8x128xf32> to vector<8x128xbf16>
    %c4_85 = arith.constant 4 : index
    %c0_86 = arith.constant 0 : index
    %c0_87 = arith.constant 0 : index
    %151 = vector.load %arg6[%c4_85, %c0_86, %c0_87] : memref<5x128x128xbf16, #tpu.memory_space<vmem>>, vector<1x128x128xbf16>
    %152 = vector.shape_cast %151 : vector<1x128x128xbf16> to vector<128x128xbf16>
    %cst_88 = arith.constant dense<0.000000e+00> : vector<8x128xf32>
    %153 = tpu.matmul %150, %152, %cst_88 {dimension_numbers = #tpu.dot_dimension_numbers<[1], [0], [0], [1], [0, 0, 1, 1], [], []>} : vector<8x128xbf16>, vector<128x128xbf16>, vector<8x128xf32> -> vector<8x128xf32>
    %c4_89 = arith.constant 4 : index
    %c0_90 = arith.constant 0 : index
    %c0_91 = arith.constant 0 : index
    %154 = vector.load %arg7[%c4_89, %c0_90, %c0_91] : memref<5x1x128xf32, #tpu.memory_space<vmem>>, vector<1x1x128xf32>
    %155 = vector.shape_cast %154 : vector<1x1x128xf32> to vector<1x128xf32>
    %156 = vector.broadcast %155 : vector<1x128xf32> to vector<8x128xf32>
    %157 = arith.addf %153, %156 : vector<8x128xf32>
    %c32_i32_92 = arith.constant 32 : i32
    %158 = vector.broadcast %c32_i32_92 : i32 to vector<8x128xi32>
    %159 = arith.cmpi slt, %1, %158 : vector<8x128xi32>
    %cst_93 = arith.constant 0.000000e+00 : f32
    %160 = vector.broadcast %cst_93 : f32 to vector<8x128xf32>
    %161 = arith.select %159, %157, %160 : vector<8x128xi1>, vector<8x128xf32>
    %c96_i32_94 = arith.constant 96 : i32
    %162 = tpu.dynamic_rotate %157 by %c96_i32_94 dim 1 : vector<8x128xf32>, i32 -> vector<8x128xf32>
    %c32_i32_95 = arith.constant 32 : i32
    %163 = vector.broadcast %c32_i32_95 : i32 to vector<8x128xi32>
    %164 = arith.cmpi slt, %1, %163 : vector<8x128xi32>
    %cst_96 = arith.constant 0.000000e+00 : f32
    %165 = vector.broadcast %cst_96 : f32 to vector<8x128xf32>
    %166 = arith.select %164, %162, %165 : vector<8x128xi1>, vector<8x128xf32>
    %167 = tpu.concatenate %161, %166 in 0 : vector<8x128xf32>, vector<8x128xf32> -> vector<16x128xf32>
    %168 = arith.truncf %167 : vector<16x128xf32> to vector<16x128xbf16>
    %cst_97 = arith.constant dense<0.000000e+00> : vector<16x128xf32>
    %169 = tpu.matmul %42, %168, %cst_97 {dimension_numbers = #tpu.dot_dimension_numbers<[1], [0], [0], [1], [0, 0, 1, 1], [], []>} : vector<16x16xbf16>, vector<16x128xbf16>, vector<16x128xf32> -> vector<16x128xf32>
    %170 = arith.addf %138, %169 : vector<16x128xf32>
    %c32_i32_98 = arith.constant 32 : i32
    %171 = vector.broadcast %c32_i32_98 : i32 to vector<16x128xi32>
    %172 = arith.cmpi slt, %0, %171 : vector<16x128xi32>
    %cst_99 = arith.constant 0.000000e+00 : f32
    %173 = vector.broadcast %cst_99 : f32 to vector<16x128xf32>
    %174 = arith.select %172, %170, %173 : vector<16x128xi1>, vector<16x128xf32>
    %c32_i32_100 = arith.constant 32 : i32
    %175 = tpu.dynamic_rotate %174 by %c32_i32_100 dim 1 : vector<16x128xf32>, i32 -> vector<16x128xf32>
    %176 = arith.addf %72, %175 : vector<16x128xf32>
    %177 = arith.truncf %176 : vector<16x128xf32> to vector<16x128xbf16>
    %c1_101 = arith.constant 1 : index
    %c0_102 = arith.constant 0 : index
    %c0_103 = arith.constant 0 : index
    %178 = vector.load %arg4[%c1_101, %c0_102, %c0_103] : memref<5x128x128xbf16, #tpu.memory_space<vmem>>, vector<1x128x128xbf16>
    %179 = vector.shape_cast %178 : vector<1x128x128xbf16> to vector<128x128xbf16>
    %cst_104 = arith.constant dense<0.000000e+00> : vector<16x128xf32>
    %180 = tpu.matmul %177, %179, %cst_104 {dimension_numbers = #tpu.dot_dimension_numbers<[1], [0], [0], [1], [0, 0, 1, 1], [], []>} : vector<16x128xbf16>, vector<128x128xbf16>, vector<16x128xf32> -> vector<16x128xf32>
    %c1_105 = arith.constant 1 : index
    %c0_106 = arith.constant 0 : index
    %c0_107 = arith.constant 0 : index
    %181 = vector.load %arg5[%c1_105, %c0_106, %c0_107] : memref<5x1x128xf32, #tpu.memory_space<vmem>>, vector<1x1x128xf32>
    %182 = vector.shape_cast %181 : vector<1x1x128xf32> to vector<1x128xf32>
    %183 = vector.broadcast %182 : vector<1x128xf32> to vector<16x128xf32>
    %184 = arith.addf %180, %183 : vector<16x128xf32>
    %cst_108 = arith.constant 0.000000e+00 : f32
    %185 = vector.broadcast %cst_108 : f32 to vector<16x128xf32>
    %186 = arith.maximumf %184, %185 : vector<16x128xf32>
    %187 = arith.truncf %186 : vector<16x128xf32> to vector<16x128xbf16>
    %c1_109 = arith.constant 1 : index
    %c0_110 = arith.constant 0 : index
    %c0_111 = arith.constant 0 : index
    %188 = vector.load %arg6[%c1_109, %c0_110, %c0_111] : memref<5x128x128xbf16, #tpu.memory_space<vmem>>, vector<1x128x128xbf16>
    %189 = vector.shape_cast %188 : vector<1x128x128xbf16> to vector<128x128xbf16>
    %cst_112 = arith.constant dense<0.000000e+00> : vector<16x128xf32>
    %190 = tpu.matmul %187, %189, %cst_112 {dimension_numbers = #tpu.dot_dimension_numbers<[1], [0], [0], [1], [0, 0, 1, 1], [], []>} : vector<16x128xbf16>, vector<128x128xbf16>, vector<16x128xf32> -> vector<16x128xf32>
    %c1_113 = arith.constant 1 : index
    %c0_114 = arith.constant 0 : index
    %c0_115 = arith.constant 0 : index
    %191 = vector.load %arg7[%c1_113, %c0_114, %c0_115] : memref<5x1x128xf32, #tpu.memory_space<vmem>>, vector<1x1x128xf32>
    %192 = vector.shape_cast %191 : vector<1x1x128xf32> to vector<1x128xf32>
    %193 = vector.broadcast %192 : vector<1x128xf32> to vector<16x128xf32>
    %194 = arith.addf %190, %193 : vector<16x128xf32>
    %c32_i32_116 = arith.constant 32 : i32
    %195 = vector.broadcast %c32_i32_116 : i32 to vector<16x128xi32>
    %196 = arith.cmpi slt, %0, %195 : vector<16x128xi32>
    %cst_117 = arith.constant 0.000000e+00 : f32
    %197 = vector.broadcast %cst_117 : f32 to vector<16x128xf32>
    %198 = arith.select %196, %194, %197 : vector<16x128xi1>, vector<16x128xf32>
    %c32_i32_118 = arith.constant 32 : i32
    %199 = tpu.dynamic_rotate %198 by %c32_i32_118 dim 1 : vector<16x128xf32>, i32 -> vector<16x128xf32>
    %200 = tpu.concatenate %198, %199 in 0 : vector<16x128xf32>, vector<16x128xf32> -> vector<32x128xf32>
    %201 = arith.truncf %200 : vector<32x128xf32> to vector<32x128xbf16>
    %cst_119 = arith.constant dense<0.000000e+00> : vector<8x128xf32>
    %202 = tpu.matmul %9, %201, %cst_119 {dimension_numbers = #tpu.dot_dimension_numbers<[1], [0], [0], [1], [0, 0, 1, 1], [], []>} : vector<8x32xbf16>, vector<32x128xbf16>, vector<8x128xf32> -> vector<8x128xf32>
    %203 = arith.truncf %202 : vector<8x128xf32> to vector<8x128xbf16>
    %c2_120 = arith.constant 2 : index
    %c0_121 = arith.constant 0 : index
    %c0_122 = arith.constant 0 : index
    %204 = vector.load %arg4[%c2_120, %c0_121, %c0_122] : memref<5x128x128xbf16, #tpu.memory_space<vmem>>, vector<1x128x128xbf16>
    %205 = vector.shape_cast %204 : vector<1x128x128xbf16> to vector<128x128xbf16>
    %cst_123 = arith.constant dense<0.000000e+00> : vector<8x128xf32>
    %206 = tpu.matmul %203, %205, %cst_123 {dimension_numbers = #tpu.dot_dimension_numbers<[1], [0], [0], [1], [0, 0, 1, 1], [], []>} : vector<8x128xbf16>, vector<128x128xbf16>, vector<8x128xf32> -> vector<8x128xf32>
    %c2_124 = arith.constant 2 : index
    %c0_125 = arith.constant 0 : index
    %c0_126 = arith.constant 0 : index
    %207 = vector.load %arg5[%c2_124, %c0_125, %c0_126] : memref<5x1x128xf32, #tpu.memory_space<vmem>>, vector<1x1x128xf32>
    %208 = vector.shape_cast %207 : vector<1x1x128xf32> to vector<1x128xf32>
    %209 = vector.broadcast %208 : vector<1x128xf32> to vector<8x128xf32>
    %210 = arith.addf %206, %209 : vector<8x128xf32>
    %cst_127 = arith.constant 0.000000e+00 : f32
    %211 = vector.broadcast %cst_127 : f32 to vector<8x128xf32>
    %212 = arith.maximumf %210, %211 : vector<8x128xf32>
    %213 = arith.truncf %212 : vector<8x128xf32> to vector<8x128xbf16>
    %c2_128 = arith.constant 2 : index
    %c0_129 = arith.constant 0 : index
    %c0_130 = arith.constant 0 : index
    %214 = vector.load %arg6[%c2_128, %c0_129, %c0_130] : memref<5x128x128xbf16, #tpu.memory_space<vmem>>, vector<1x128x128xbf16>
    %215 = vector.shape_cast %214 : vector<1x128x128xbf16> to vector<128x128xbf16>
    %cst_131 = arith.constant dense<0.000000e+00> : vector<8x128xf32>
    %216 = tpu.matmul %213, %215, %cst_131 {dimension_numbers = #tpu.dot_dimension_numbers<[1], [0], [0], [1], [0, 0, 1, 1], [], []>} : vector<8x128xbf16>, vector<128x128xbf16>, vector<8x128xf32> -> vector<8x128xf32>
    %c2_132 = arith.constant 2 : index
    %c0_133 = arith.constant 0 : index
    %c0_134 = arith.constant 0 : index
    %217 = vector.load %arg7[%c2_132, %c0_133, %c0_134] : memref<5x1x128xf32, #tpu.memory_space<vmem>>, vector<1x1x128xf32>
    %218 = vector.shape_cast %217 : vector<1x1x128xf32> to vector<1x128xf32>
    %219 = vector.broadcast %218 : vector<1x128xf32> to vector<8x128xf32>
    %220 = arith.addf %216, %219 : vector<8x128xf32>
    %c32_i32_135 = arith.constant 32 : i32
    %221 = vector.broadcast %c32_i32_135 : i32 to vector<8x128xi32>
    %222 = arith.cmpi slt, %1, %221 : vector<8x128xi32>
    %cst_136 = arith.constant 0.000000e+00 : f32
    %223 = vector.broadcast %cst_136 : f32 to vector<8x128xf32>
    %224 = arith.select %222, %220, %223 : vector<8x128xi1>, vector<8x128xf32>
    %c96_i32_137 = arith.constant 96 : i32
    %225 = tpu.dynamic_rotate %220 by %c96_i32_137 dim 1 : vector<8x128xf32>, i32 -> vector<8x128xf32>
    %c32_i32_138 = arith.constant 32 : i32
    %226 = vector.broadcast %c32_i32_138 : i32 to vector<8x128xi32>
    %227 = arith.cmpi slt, %1, %226 : vector<8x128xi32>
    %cst_139 = arith.constant 0.000000e+00 : f32
    %228 = vector.broadcast %cst_139 : f32 to vector<8x128xf32>
    %229 = arith.select %227, %225, %228 : vector<8x128xi1>, vector<8x128xf32>
    %230 = tpu.concatenate %224, %229 in 0 : vector<8x128xf32>, vector<8x128xf32> -> vector<16x128xf32>
    %231 = arith.truncf %230 : vector<16x128xf32> to vector<16x128xbf16>
    %cst_140 = arith.constant dense<0.000000e+00> : vector<16x128xf32>
    %232 = tpu.matmul %28, %231, %cst_140 {dimension_numbers = #tpu.dot_dimension_numbers<[1], [0], [0], [1], [0, 0, 1, 1], [], []>} : vector<16x16xbf16>, vector<16x128xbf16>, vector<16x128xf32> -> vector<16x128xf32>
    %cst_141 = arith.constant dense<0.000000e+00> : vector<8x128xf32>
    %233 = tpu.matmul %15, %201, %cst_141 {dimension_numbers = #tpu.dot_dimension_numbers<[1], [0], [0], [1], [0, 0, 1, 1], [], []>} : vector<8x32xbf16>, vector<32x128xbf16>, vector<8x128xf32> -> vector<8x128xf32>
    %234 = arith.truncf %233 : vector<8x128xf32> to vector<8x128xbf16>
    %c3_142 = arith.constant 3 : index
    %c0_143 = arith.constant 0 : index
    %c0_144 = arith.constant 0 : index
    %235 = vector.load %arg4[%c3_142, %c0_143, %c0_144] : memref<5x128x128xbf16, #tpu.memory_space<vmem>>, vector<1x128x128xbf16>
    %236 = vector.shape_cast %235 : vector<1x128x128xbf16> to vector<128x128xbf16>
    %cst_145 = arith.constant dense<0.000000e+00> : vector<8x128xf32>
    %237 = tpu.matmul %234, %236, %cst_145 {dimension_numbers = #tpu.dot_dimension_numbers<[1], [0], [0], [1], [0, 0, 1, 1], [], []>} : vector<8x128xbf16>, vector<128x128xbf16>, vector<8x128xf32> -> vector<8x128xf32>
    %c3_146 = arith.constant 3 : index
    %c0_147 = arith.constant 0 : index
    %c0_148 = arith.constant 0 : index
    %238 = vector.load %arg5[%c3_146, %c0_147, %c0_148] : memref<5x1x128xf32, #tpu.memory_space<vmem>>, vector<1x1x128xf32>
    %239 = vector.shape_cast %238 : vector<1x1x128xf32> to vector<1x128xf32>
    %240 = vector.broadcast %239 : vector<1x128xf32> to vector<8x128xf32>
    %241 = arith.addf %237, %240 : vector<8x128xf32>
    %cst_149 = arith.constant 0.000000e+00 : f32
    %242 = vector.broadcast %cst_149 : f32 to vector<8x128xf32>
    %243 = arith.maximumf %241, %242 : vector<8x128xf32>
    %244 = arith.truncf %243 : vector<8x128xf32> to vector<8x128xbf16>
    %c3_150 = arith.constant 3 : index
    %c0_151 = arith.constant 0 : index
    %c0_152 = arith.constant 0 : index
    %245 = vector.load %arg6[%c3_150, %c0_151, %c0_152] : memref<5x128x128xbf16, #tpu.memory_space<vmem>>, vector<1x128x128xbf16>
    %246 = vector.shape_cast %245 : vector<1x128x128xbf16> to vector<128x128xbf16>
    %cst_153 = arith.constant dense<0.000000e+00> : vector<8x128xf32>
    %247 = tpu.matmul %244, %246, %cst_153 {dimension_numbers = #tpu.dot_dimension_numbers<[1], [0], [0], [1], [0, 0, 1, 1], [], []>} : vector<8x128xbf16>, vector<128x128xbf16>, vector<8x128xf32> -> vector<8x128xf32>
    %c3_154 = arith.constant 3 : index
    %c0_155 = arith.constant 0 : index
    %c0_156 = arith.constant 0 : index
    %248 = vector.load %arg7[%c3_154, %c0_155, %c0_156] : memref<5x1x128xf32, #tpu.memory_space<vmem>>, vector<1x1x128xf32>
    %249 = vector.shape_cast %248 : vector<1x1x128xf32> to vector<1x128xf32>
    %250 = vector.broadcast %249 : vector<1x128xf32> to vector<8x128xf32>
    %251 = arith.addf %247, %250 : vector<8x128xf32>
    %c32_i32_157 = arith.constant 32 : i32
    %252 = vector.broadcast %c32_i32_157 : i32 to vector<8x128xi32>
    %253 = arith.cmpi slt, %1, %252 : vector<8x128xi32>
    %cst_158 = arith.constant 0.000000e+00 : f32
    %254 = vector.broadcast %cst_158 : f32 to vector<8x128xf32>
    %255 = arith.select %253, %251, %254 : vector<8x128xi1>, vector<8x128xf32>
    %c96_i32_159 = arith.constant 96 : i32
    %256 = tpu.dynamic_rotate %251 by %c96_i32_159 dim 1 : vector<8x128xf32>, i32 -> vector<8x128xf32>
    %c32_i32_160 = arith.constant 32 : i32
    %257 = vector.broadcast %c32_i32_160 : i32 to vector<8x128xi32>
    %258 = arith.cmpi slt, %1, %257 : vector<8x128xi32>
    %cst_161 = arith.constant 0.000000e+00 : f32
    %259 = vector.broadcast %cst_161 : f32 to vector<8x128xf32>
    %260 = arith.select %258, %256, %259 : vector<8x128xi1>, vector<8x128xf32>
    %261 = tpu.concatenate %255, %260 in 0 : vector<8x128xf32>, vector<8x128xf32> -> vector<16x128xf32>
    %262 = arith.truncf %261 : vector<16x128xf32> to vector<16x128xbf16>
    %cst_162 = arith.constant dense<0.000000e+00> : vector<16x128xf32>
    %263 = tpu.matmul %35, %262, %cst_162 {dimension_numbers = #tpu.dot_dimension_numbers<[1], [0], [0], [1], [0, 0, 1, 1], [], []>} : vector<16x16xbf16>, vector<16x128xbf16>, vector<16x128xf32> -> vector<16x128xf32>
    %264 = arith.addf %232, %263 : vector<16x128xf32>
    %cst_163 = arith.constant dense<0.000000e+00> : vector<8x128xf32>
    %265 = tpu.matmul %21, %201, %cst_163 {dimension_numbers = #tpu.dot_dimension_numbers<[1], [0], [0], [1], [0, 0, 1, 1], [], []>} : vector<8x32xbf16>, vector<32x128xbf16>, vector<8x128xf32> -> vector<8x128xf32>
    %266 = arith.truncf %265 : vector<8x128xf32> to vector<8x128xbf16>
    %c4_164 = arith.constant 4 : index
    %c0_165 = arith.constant 0 : index
    %c0_166 = arith.constant 0 : index
    %267 = vector.load %arg4[%c4_164, %c0_165, %c0_166] : memref<5x128x128xbf16, #tpu.memory_space<vmem>>, vector<1x128x128xbf16>
    %268 = vector.shape_cast %267 : vector<1x128x128xbf16> to vector<128x128xbf16>
    %cst_167 = arith.constant dense<0.000000e+00> : vector<8x128xf32>
    %269 = tpu.matmul %266, %268, %cst_167 {dimension_numbers = #tpu.dot_dimension_numbers<[1], [0], [0], [1], [0, 0, 1, 1], [], []>} : vector<8x128xbf16>, vector<128x128xbf16>, vector<8x128xf32> -> vector<8x128xf32>
    %c4_168 = arith.constant 4 : index
    %c0_169 = arith.constant 0 : index
    %c0_170 = arith.constant 0 : index
    %270 = vector.load %arg5[%c4_168, %c0_169, %c0_170] : memref<5x1x128xf32, #tpu.memory_space<vmem>>, vector<1x1x128xf32>
    %271 = vector.shape_cast %270 : vector<1x1x128xf32> to vector<1x128xf32>
    %272 = vector.broadcast %271 : vector<1x128xf32> to vector<8x128xf32>
    %273 = arith.addf %269, %272 : vector<8x128xf32>
    %cst_171 = arith.constant 0.000000e+00 : f32
    %274 = vector.broadcast %cst_171 : f32 to vector<8x128xf32>
    %275 = arith.maximumf %273, %274 : vector<8x128xf32>
    %276 = arith.truncf %275 : vector<8x128xf32> to vector<8x128xbf16>
    %c4_172 = arith.constant 4 : index
    %c0_173 = arith.constant 0 : index
    %c0_174 = arith.constant 0 : index
    %277 = vector.load %arg6[%c4_172, %c0_173, %c0_174] : memref<5x128x128xbf16, #tpu.memory_space<vmem>>, vector<1x128x128xbf16>
    %278 = vector.shape_cast %277 : vector<1x128x128xbf16> to vector<128x128xbf16>
    %cst_175 = arith.constant dense<0.000000e+00> : vector<8x128xf32>
    %279 = tpu.matmul %276, %278, %cst_175 {dimension_numbers = #tpu.dot_dimension_numbers<[1], [0], [0], [1], [0, 0, 1, 1], [], []>} : vector<8x128xbf16>, vector<128x128xbf16>, vector<8x128xf32> -> vector<8x128xf32>
    %c4_176 = arith.constant 4 : index
    %c0_177 = arith.constant 0 : index
    %c0_178 = arith.constant 0 : index
    %280 = vector.load %arg7[%c4_176, %c0_177, %c0_178] : memref<5x1x128xf32, #tpu.memory_space<vmem>>, vector<1x1x128xf32>
    %281 = vector.shape_cast %280 : vector<1x1x128xf32> to vector<1x128xf32>
    %282 = vector.broadcast %281 : vector<1x128xf32> to vector<8x128xf32>
    %283 = arith.addf %279, %282 : vector<8x128xf32>
    %c32_i32_179 = arith.constant 32 : i32
    %284 = vector.broadcast %c32_i32_179 : i32 to vector<8x128xi32>
    %285 = arith.cmpi slt, %1, %284 : vector<8x128xi32>
    %cst_180 = arith.constant 0.000000e+00 : f32
    %286 = vector.broadcast %cst_180 : f32 to vector<8x128xf32>
    %287 = arith.select %285, %283, %286 : vector<8x128xi1>, vector<8x128xf32>
    %c96_i32_181 = arith.constant 96 : i32
    %288 = tpu.dynamic_rotate %283 by %c96_i32_181 dim 1 : vector<8x128xf32>, i32 -> vector<8x128xf32>
    %c32_i32_182 = arith.constant 32 : i32
    %289 = vector.broadcast %c32_i32_182 : i32 to vector<8x128xi32>
    %290 = arith.cmpi slt, %1, %289 : vector<8x128xi32>
    %cst_183 = arith.constant 0.000000e+00 : f32
    %291 = vector.broadcast %cst_183 : f32 to vector<8x128xf32>
    %292 = arith.select %290, %288, %291 : vector<8x128xi1>, vector<8x128xf32>
    %293 = tpu.concatenate %287, %292 in 0 : vector<8x128xf32>, vector<8x128xf32> -> vector<16x128xf32>
    %294 = arith.truncf %293 : vector<16x128xf32> to vector<16x128xbf16>
    %cst_184 = arith.constant dense<0.000000e+00> : vector<16x128xf32>
    %295 = tpu.matmul %42, %294, %cst_184 {dimension_numbers = #tpu.dot_dimension_numbers<[1], [0], [0], [1], [0, 0, 1, 1], [], []>} : vector<16x16xbf16>, vector<16x128xbf16>, vector<16x128xf32> -> vector<16x128xf32>
    %296 = arith.addf %264, %295 : vector<16x128xf32>
    %c32_i32_185 = arith.constant 32 : i32
    %297 = vector.broadcast %c32_i32_185 : i32 to vector<16x128xi32>
    %298 = arith.cmpi slt, %0, %297 : vector<16x128xi32>
    %cst_186 = arith.constant 0.000000e+00 : f32
    %299 = vector.broadcast %cst_186 : f32 to vector<16x128xf32>
    %300 = arith.select %298, %296, %299 : vector<16x128xi1>, vector<16x128xf32>
    %c32_i32_187 = arith.constant 32 : i32
    %301 = tpu.dynamic_rotate %300 by %c32_i32_187 dim 1 : vector<16x128xf32>, i32 -> vector<16x128xf32>
    %302 = arith.addf %198, %301 : vector<16x128xf32>
    %303 = arith.truncf %302 : vector<16x128xf32> to vector<16x128xbf16>
    %c1_188 = arith.constant 1 : index
    %c0_189 = arith.constant 0 : index
    %c0_190 = arith.constant 0 : index
    %304 = vector.load %arg4[%c1_188, %c0_189, %c0_190] : memref<5x128x128xbf16, #tpu.memory_space<vmem>>, vector<1x128x128xbf16>
    %305 = vector.shape_cast %304 : vector<1x128x128xbf16> to vector<128x128xbf16>
    %cst_191 = arith.constant dense<0.000000e+00> : vector<16x128xf32>
    %306 = tpu.matmul %303, %305, %cst_191 {dimension_numbers = #tpu.dot_dimension_numbers<[1], [0], [0], [1], [0, 0, 1, 1], [], []>} : vector<16x128xbf16>, vector<128x128xbf16>, vector<16x128xf32> -> vector<16x128xf32>
    %c1_192 = arith.constant 1 : index
    %c0_193 = arith.constant 0 : index
    %c0_194 = arith.constant 0 : index
    %307 = vector.load %arg5[%c1_192, %c0_193, %c0_194] : memref<5x1x128xf32, #tpu.memory_space<vmem>>, vector<1x1x128xf32>
    %308 = vector.shape_cast %307 : vector<1x1x128xf32> to vector<1x128xf32>
    %309 = vector.broadcast %308 : vector<1x128xf32> to vector<16x128xf32>
    %310 = arith.addf %306, %309 : vector<16x128xf32>
    %cst_195 = arith.constant 0.000000e+00 : f32
    %311 = vector.broadcast %cst_195 : f32 to vector<16x128xf32>
    %312 = arith.maximumf %310, %311 : vector<16x128xf32>
    %313 = arith.truncf %312 : vector<16x128xf32> to vector<16x128xbf16>
    %c1_196 = arith.constant 1 : index
    %c0_197 = arith.constant 0 : index
    %c0_198 = arith.constant 0 : index
    %314 = vector.load %arg6[%c1_196, %c0_197, %c0_198] : memref<5x128x128xbf16, #tpu.memory_space<vmem>>, vector<1x128x128xbf16>
    %315 = vector.shape_cast %314 : vector<1x128x128xbf16> to vector<128x128xbf16>
    %cst_199 = arith.constant dense<0.000000e+00> : vector<16x128xf32>
    %316 = tpu.matmul %313, %315, %cst_199 {dimension_numbers = #tpu.dot_dimension_numbers<[1], [0], [0], [1], [0, 0, 1, 1], [], []>} : vector<16x128xbf16>, vector<128x128xbf16>, vector<16x128xf32> -> vector<16x128xf32>
    %c1_200 = arith.constant 1 : index
    %c0_201 = arith.constant 0 : index
    %c0_202 = arith.constant 0 : index
    %317 = vector.load %arg7[%c1_200, %c0_201, %c0_202] : memref<5x1x128xf32, #tpu.memory_space<vmem>>, vector<1x1x128xf32>
    %318 = vector.shape_cast %317 : vector<1x1x128xf32> to vector<1x128xf32>
    %319 = vector.broadcast %318 : vector<1x128xf32> to vector<16x128xf32>
    %320 = arith.addf %316, %319 : vector<16x128xf32>
    %321 = arith.truncf %320 : vector<16x128xf32> to vector<16x128xbf16>
    %cst_203 = arith.constant dense<0.000000e+00> : vector<8x128xf32>
    %322 = tpu.matmul %49, %321, %cst_203 {dimension_numbers = #tpu.dot_dimension_numbers<[1], [0], [0], [1], [0, 0, 1, 1], [], []>} : vector<8x16xbf16>, vector<16x128xbf16>, vector<8x128xf32> -> vector<8x128xf32>
    %c0_204 = arith.constant 0 : index
    %c0_205 = arith.constant 0 : index
    %323 = vector.load %arg8[%c0_204, %c0_205] : memref<8x128xf32, #tpu.memory_space<vmem>>, vector<8x128xf32>
    tpu.vector_store %arg8[%c0_204, %c0_205], %322 {strides = array<i32>} : memref<8x128xf32, #tpu.memory_space<vmem>>, vector<8x128xf32>,
    return
  }
}

</mosaic_0001>

<llo_original>
// kernel: hetero_gnn_forward.1
$region0: #{hetero_gnn_forward.1}
  #allocation0 [shape = 'u32[]', space=smem, size = 0x4, offset = 0x4, fixed_abs, tag = 'smem constant byte address 0x4 - core index']
  #allocation1 [shape = 'u32[144,128]{1,0:T(1,128)}', space=vmem, size = 0x12000, scoped, tag = 'internal scratch']
  %s0 = inlined_call_operand.vmem [shape: f32[16,128], index: 0, kind: input, shape index: {}]
  %s1 = inlined_call_operand.vmem [shape: s32[3,8,32], index: 1, kind: input, shape index: {}]
  %s2 = inlined_call_operand.vmem [shape: s32[3,1,16], index: 2, kind: input, shape index: {}]
  %s3 = inlined_call_operand.vmem [shape: s32[1,16], index: 3, kind: input, shape index: {}]
  %s4 = inlined_call_operand.vmem [shape: bf16[5,128,128], index: 4, kind: input, shape index: {}]
  %s5 = inlined_call_operand.vmem [shape: f32[5,1,128], index: 5, kind: input, shape index: {}]
  %s6 = inlined_call_operand.vmem [shape: bf16[5,128,128], index: 6, kind: input, shape index: {}]
  %s7 = inlined_call_operand.vmem [shape: f32[5,1,128], index: 7, kind: input, shape index: {}]
  %s8 = inlined_call_operand.vmem [shape: f32[8,128], index: 8, kind: output, shape index: {}]
  %s9 = sld [smem:[#allocation0]]
  $region42: #{hetero_gnn_forward.1} parent=0
    _
  %s11 = ssub.s32 1, %s9
  %s12 = scalar_select 0, %s11, %s9
  // Predicated region
  $region2: #{hetero_gnn_forward.1} parent=0 // pred_check
    _
  $region3: #{hetero_gnn_forward.1} parent=0 // pred_check_branch
    %14 = sbr.rel (0) target = $region5
  $region4: #{hetero_gnn_forward.1} parent=0 // pred_region
    _
  $region5: #{hetero_gnn_forward.1} parent=0 // pred_fallthru
    _
  // Predicated region
  $region6: #{hetero_gnn_forward.1} parent=0 // pred_check
    _
  $region7: #{hetero_gnn_forward.1} parent=0 // pred_check_branch
    %16 = sbr.rel (0) target = $region9
  $region8: #{hetero_gnn_forward.1} parent=0 // pred_region
    _
  $region9: #{hetero_gnn_forward.1} parent=0 // pred_fallthru
    _
  // Predicated region
  $region10: #{hetero_gnn_forward.1} parent=0 // pred_check
    _
  $region11: #{hetero_gnn_forward.1} parent=0 // pred_check_branch
    %18 = sbr.rel (0) target = $region13
  $region12: #{hetero_gnn_forward.1} parent=0 // pred_region
    _
  $region13: #{hetero_gnn_forward.1} parent=0 // pred_fallthru
    _
  // Predicated region
  $region14: #{hetero_gnn_forward.1} parent=0 // pred_check
    _
  $region15: #{hetero_gnn_forward.1} parent=0 // pred_check_branch
    %20 = sbr.rel (0) target = $region17
  $region16: #{hetero_gnn_forward.1} parent=0 // pred_region
    _
  $region17: #{hetero_gnn_forward.1} parent=0 // pred_fallthru
    _
  // Predicated region
  $region18: #{hetero_gnn_forward.1} parent=0 // pred_check
    _
  $region19: #{hetero_gnn_forward.1} parent=0 // pred_check_branch
    %22 = sbr.rel (0) target = $region21
  $region20: #{hetero_gnn_forward.1} parent=0 // pred_region
    _
  $region21: #{hetero_gnn_forward.1} parent=0 // pred_fallthru
    _
  // Predicated region
  $region22: #{hetero_gnn_forward.1} parent=0 // pred_check
    _
  $region23: #{hetero_gnn_forward.1} parent=0 // pred_check_branch
    %24 = sbr.rel (0) target = $region25
  $region24: #{hetero_gnn_forward.1} parent=0 // pred_region
    _
  $region25: #{hetero_gnn_forward.1} parent=0 // pred_fallthru
    _
  // Predicated region
  $region26: #{hetero_gnn_forward.1} parent=0 // pred_check
    _
  $region27: #{hetero_gnn_forward.1} parent=0 // pred_check_branch
    %26 = sbr.rel (0) target = $region29
  $region28: #{hetero_gnn_forward.1} parent=0 // pred_region
    _
  $region29: #{hetero_gnn_forward.1} parent=0 // pred_fallthru
    _
  // Predicated region
  $region30: #{hetero_gnn_forward.1} parent=0 // pred_check
    _
  $region31: #{hetero_gnn_forward.1} parent=0 // pred_check_branch
    %28 = sbr.rel (0) target = $region33
  $region32: #{hetero_gnn_forward.1} parent=0 // pred_region
    _
  $region33: #{hetero_gnn_forward.1} parent=0 // pred_fallthru
    _
  %v30 = vlaneseq
  %v31 = vand.u32 %v30, 127
  %v32 = vlaneseq
  %v33 = vshrl.u32 %v32, 7
  %v34 = vadd.s32 %v33, 8
  %v35 = vld [vmem:[%s1] sm:$0xff]
  %vm36 = vcmp.eq.s32.totalorder %v35, %v31
  %v37 = vsel %vm36, 1, 0
  %v38 = vcvt.s32.f32 %v37
  %v39 = vpack.c.bf16 %v38, %v38
  %s40 = scalar_lea.vmem %s1, 8
  %v41 = vld [vmem:[%s40] sm:$0xff]
  %vm42 = vcmp.eq.s32.totalorder %v41, %v31
  %v43 = vsel %vm42, 1, 0
  %v44 = vcvt.s32.f32 %v43
  %v45 = vpack.c.bf16 %v44, %v44
  %s46 = scalar_lea.vmem %s1, 16
  %v47 = vld [vmem:[%s46] sm:$0xff]
  %vm48 = vcmp.eq.s32.totalorder %v47, %v31
  %v49 = vsel %vm48, 1, 0
  %v50 = vcvt.s32.f32 %v49
  %v51 = vpack.c.bf16 %v50, %v50
  %v52 = vld [vmem:[%s2] sm:$0x1]
  %v53 = vlaneseq
  %v54 = vshrl.u32 %v53, 7
  %v55 = vsub.s32 0, %v54
  %v56 = vrot.slane %v52, %v55
  %vm57 = vcmp.eq.s32.totalorder %v56, %v33
  %vm58 = vcmp.eq.s32.totalorder %v56, %v34
  %v59 = vsel %vm57, 1, 0
  %v60 = vsel %vm58, 1, 0
  %v61 = vcvt.s32.f32 %v59
  %v62 = vcvt.s32.f32 %v60
  %v63 = vpack.c.bf16 %v62, %v61
  %s64 = scalar_lea.vmem %s2, 1
  %v65 = vld [vmem:[%s64] sm:$0x1]
  %v66 = vlaneseq
  %v67 = vshrl.u32 %v66, 7
  %v68 = vsub.s32 0, %v67
  %v69 = vrot.slane %v65, %v68
  %vm70 = vcmp.eq.s32.totalorder %v69, %v33
  %vm71 = vcmp.eq.s32.totalorder %v69, %v34
  %v72 = vsel %vm70, 1, 0
  %v73 = vsel %vm71, 1, 0
  %v74 = vcvt.s32.f32 %v72
  %v75 = vcvt.s32.f32 %v73
  %v76 = vpack.c.bf16 %v75, %v74
  %s77 = scalar_lea.vmem %s2, 2
  %v78 = vld [vmem:[%s77] sm:$0x1]
  %v79 = vlaneseq
  %v80 = vshrl.u32 %v79, 7
  %v81 = vsub.s32 0, %v80
  %v82 = vrot.slane %v78, %v81
  %vm83 = vcmp.eq.s32.totalorder %v82, %v33
  %vm84 = vcmp.eq.s32.totalorder %v82, %v34
  %v85 = vsel %vm83, 1, 0
  %v86 = vsel %vm84, 1, 0
  %v87 = vcvt.s32.f32 %v85
  %v88 = vcvt.s32.f32 %v86
  %v89 = vpack.c.bf16 %v88, %v87
  %v90 = vld [vmem:[%s3] sm:$0x1]
  %v91 = vlaneseq
  %v92 = vshrl.u32 %v91, 7
  %v93 = vsub.s32 0, %v92
  %v94 = vrot.slane %v90, %v93
  %vm95 = vcmp.eq.s32.totalorder %v94, %v33
  %v96 = vsel %vm95, 1, 0
  %v97 = vcvt.s32.f32 %v96
  %v98 = vpack.c.bf16 %v97, %v97
  %v99 = vld [vmem:[%s0] sm:$0xff]
  %v100 = vld [vmem:[%s0 + $0x8] sm:$0xff]
  %v101 = vpack.c.bf16 %v100, %v99
  %v102 = vld [vmem:[%s4] sm:$0xf]
  %v103 = vld [vmem:[%s4 + $0x4] sm:$0xf]
  %v104 = vld [vmem:[%s4 + $0x8] sm:$0xf]
  %v105 = vld [vmem:[%s4 + $0xc] sm:$0xf]
  %v106 = vld [vmem:[%s4 + $0x10] sm:$0xf]
  %v107 = vld [vmem:[%s4 + $0x14] sm:$0xf]
  %v108 = vld [vmem:[%s4 + $0x18] sm:$0xf]
  %v109 = vld [vmem:[%s4 + $0x1c] sm:$0xf]
  %v110 = vld [vmem:[%s4 + $0x20] sm:$0xf]
  %v111 = vld [vmem:[%s4 + $0x24] sm:$0xf]
  %v112 = vld [vmem:[%s4 + $0x28] sm:$0xf]
  %v113 = vld [vmem:[%s4 + $0x2c] sm:$0xf]
  %v114 = vld [vmem:[%s4 + $0x30] sm:$0xf]
  %v115 = vld [vmem:[%s4 + $0x34] sm:$0xf]
  %v116 = vld [vmem:[%s4 + $0x38] sm:$0xf]
  %v117 = vld [vmem:[%s4 + $0x3c] sm:$0xf]
  %v118 = vld [vmem:[%s5] sm:$0x1]
  %v120 = vlaneseq
  %v121 = vshrl.u32 %v120, 7
  %v122 = vsub.s32 0, %v121
  %v123 = vrot.slane %v118, %v122
  %v141 = vunpack.c.l.b16 %v102
  %v142 = vunpack.c.l.b16 %v103
  %v143 = vunpack.c.l.b16 %v104
  %v144 = vunpack.c.l.b16 %v105
  %v145 = vunpack.c.l.b16 %v106
  %v146 = vunpack.c.l.b16 %v107
  %v147 = vunpack.c.l.b16 %v108
  %v148 = vunpack.c.l.b16 %v109
  %v149 = vunpack.c.l.b16 %v110
  %v150 = vunpack.c.l.b16 %v111
  %v151 = vunpack.c.l.b16 %v112
  %v152 = vunpack.c.l.b16 %v113
  %v153 = vunpack.c.l.b16 %v114
  %v154 = vunpack.c.l.b16 %v115
  %v155 = vunpack.c.l.b16 %v116
  %v156 = vunpack.c.l.b16 %v117
  %v157 = vpack.c.b16 %v142, %v141
  %v158 = vpack.c.b16 %v144, %v143
  %v159 = vpack.c.b16 %v146, %v145
  %v160 = vpack.c.b16 %v148, %v147
  %v161 = vpack.c.b16 %v150, %v149
  %v162 = vpack.c.b16 %v152, %v151
  %v163 = vpack.c.b16 %v154, %v153
  %v164 = vpack.c.b16 %v156, %v155
  %173 = vmatprep.subr.bf16.mxu0 0
  %174 = vmatpush1.bf16.msra.mxu0 %v157
  %175 = vmatprep.subr.bf16.mxu0 0
  %176 = vmatpush1.bf16.msra.mxu0 %v158
  %177 = vmatprep.subr.bf16.mxu0 0
  %178 = vmatpush1.bf16.msra.mxu0 %v159
  %179 = vmatprep.subr.bf16.mxu0 0
  %180 = vmatpush1.bf16.msra.mxu0 %v160
  %181 = vmatprep.subr.bf16.mxu0 0
  %182 = vmatpush1.bf16.msra.mxu0 %v161
  %183 = vmatprep.subr.bf16.mxu0 0
  %184 = vmatpush1.bf16.msra.mxu0 %v162
  %185 = vmatprep.subr.bf16.mxu0 0
  %186 = vmatpush1.bf16.msra.mxu0 %v163
  %187 = vmatprep.subr.bf16.mxu0 0
  %188 = vmatpush1.bf16.msra.mxu0 %v164
  %189 = vmatprep.subr.bf16.mxu0 0
  %190 = vmatpush1.bf16.msra.mxu0 0
  %191 = vmatprep.subr.bf16.mxu0 0
  %192 = vmatpush1.bf16.msra.mxu0 0
  %193 = vmatprep.subr.bf16.mxu0 0
  %194 = vmatpush1.bf16.msra.mxu0 0
  %195 = vmatprep.subr.bf16.mxu0 0
  %196 = vmatpush1.bf16.msra.mxu0 0
  %197 = vmatprep.subr.bf16.mxu0 0
  %198 = vmatpush1.bf16.msra.mxu0 0
  %199 = vmatprep.subr.bf16.mxu0 0
  %200 = vmatpush1.bf16.msra.mxu0 0
  %201 = vmatprep.subr.bf16.mxu0 0
  %202 = vmatpush1.bf16.msra.mxu0 0
  %203 = vmatprep.subr.bf16.mxu0 0
  %204 = vmatpush1.bf16.msra.mxu0 0
  %205 = vmatprep.mubr.bf16.mxu0 0
  %206 = vmatmul.mubr.bf16.gmra.mrb[0].mxu0 %v101
  %v207 = vpop.f32.mrb[0].mxu0
  %v208 = vadd.f32 %v123, %v207
  %v209 = vpop.f32.mrb[0].mxu0
  %v210 = vpop.f32.mrb[0].mxu0
  %v211 = vadd.f32 %v123, %v210
  %v212 = vpop.f32.mrb[0].mxu0
  %213 = vdwg.mxu0
  %v214 = vmax.f32 %v208, 0.0
  %v215 = vmax.f32 %v211, 0.0
  %v216 = vpack.c.bf16 %v215, %v214
  %v217 = vld [vmem:[%s6] sm:$0xf]
  %v218 = vld [vmem:[%s6 + $0x4] sm:$0xf]
  %v219 = vld [vmem:[%s6 + $0x8] sm:$0xf]
  %v220 = vld [vmem:[%s6 + $0xc] sm:$0xf]
  %v221 = vld [vmem:[%s6 + $0x10] sm:$0xf]
  %v222 = vld [vmem:[%s6 + $0x14] sm:$0xf]
  %v223 = vld [vmem:[%s6 + $0x18] sm:$0xf]
  %v224 = vld [vmem:[%s6 + $0x1c] sm:$0xf]
  %v225 = vld [vmem:[%s6 + $0x20] sm:$0xf]
  %v226 = vld [vmem:[%s6 + $0x24] sm:$0xf]
  %v227 = vld [vmem:[%s6 + $0x28] sm:$0xf]
  %v228 = vld [vmem:[%s6 + $0x2c] sm:$0xf]
  %v229 = vld [vmem:[%s6 + $0x30] sm:$0xf]
  %v230 = vld [vmem:[%s6 + $0x34] sm:$0xf]
  %v231 = vld [vmem:[%s6 + $0x38] sm:$0xf]
  %v232 = vld [vmem:[%s6 + $0x3c] sm:$0xf]
  %v233 = vld [vmem:[%s7] sm:$0x1]
  %v235 = vlaneseq
  %v236 = vshrl.u32 %v235, 7
  %v237 = vsub.s32 0, %v236
  %v238 = vrot.slane %v233, %v237
  %v256 = vunpack.c.l.b16 %v217
  %v257 = vunpack.c.l.b16 %v218
  %v258 = vunpack.c.l.b16 %v219
  %v259 = vunpack.c.l.b16 %v220
  %v260 = vunpack.c.l.b16 %v221
  %v261 = vunpack.c.l.b16 %v222
  %v262 = vunpack.c.l.b16 %v223
  %v263 = vunpack.c.l.b16 %v224
  %v264 = vunpack.c.l.b16 %v225
  %v265 = vunpack.c.l.b16 %v226
  %v266 = vunpack.c.l.b16 %v227
  %v267 = vunpack.c.l.b16 %v228
  %v268 = vunpack.c.l.b16 %v229
  %v269 = vunpack.c.l.b16 %v230
  %v270 = vunpack.c.l.b16 %v231
  %v271 = vunpack.c.l.b16 %v232
  %v272 = vpack.c.b16 %v257, %v256
  %v273 = vpack.c.b16 %v259, %v258
  %v274 = vpack.c.b16 %v261, %v260
  %v275 = vpack.c.b16 %v263, %v262
  %v276 = vpack.c.b16 %v265, %v264
  %v277 = vpack.c.b16 %v267, %v266
  %v278 = vpack.c.b16 %v269, %v268
  %v279 = vpack.c.b16 %v271, %v270
  %288 = vmatprep.subr.bf16.mxu0 0
  %289 = vmatpush1.bf16.msra.mxu0 %v272
  %290 = vmatprep.subr.bf16.mxu0 0
  %291 = vmatpush1.bf16.msra.mxu0 %v273
  %292 = vmatprep.subr.bf16.mxu0 0
  %293 = vmatpush1.bf16.msra.mxu0 %v274
  %294 = vmatprep.subr.bf16.mxu0 0
  %295 = vmatpush1.bf16.msra.mxu0 %v275
  %296 = vmatprep.subr.bf16.mxu0 0
  %297 = vmatpush1.bf16.msra.mxu0 %v276
  %298 = vmatprep.subr.bf16.mxu0 0
  %299 = vmatpush1.bf16.msra.mxu0 %v277
  %300 = vmatprep.subr.bf16.mxu0 0
  %301 = vmatpush1.bf16.msra.mxu0 %v278
  %302 = vmatprep.subr.bf16.mxu0 0
  %303 = vmatpush1.bf16.msra.mxu0 %v279
  %304 = vmatprep.subr.bf16.mxu0 0
  %305 = vmatpush1.bf16.msra.mxu0 0
  %306 = vmatprep.subr.bf16.mxu0 0
  %307 = vmatpush1.bf16.msra.mxu0 0
  %308 = vmatprep.subr.bf16.mxu0 0
  %309 = vmatpush1.bf16.msra.mxu0 0
  %310 = vmatprep.subr.bf16.mxu0 0
  %311 = vmatpush1.bf16.msra.mxu0 0
  %312 = vmatprep.subr.bf16.mxu0 0
  %313 = vmatpush1.bf16.msra.mxu0 0
  %314 = vmatprep.subr.bf16.mxu0 0
  %315 = vmatpush1.bf16.msra.mxu0 0
  %316 = vmatprep.subr.bf16.mxu0 0
  %317 = vmatpush1.bf16.msra.mxu0 0
  %318 = vmatprep.subr.bf16.mxu0 0
  %319 = vmatpush1.bf16.msra.mxu0 0
  %320 = vmatprep.mubr.bf16.mxu0 0
  %321 = vmatmul.mubr.bf16.gmra.mrb[0].mxu0 %v216
  %v322 = vpop.f32.mrb[0].mxu0
  %v323 = vadd.f32 %v238, %v322
  %v324 = vpop.f32.mrb[0].mxu0
  %v325 = vpop.f32.mrb[0].mxu0
  %v326 = vadd.f32 %v238, %v325
  %v327 = vpop.f32.mrb[0].mxu0
  %328 = vdwg.mxu0
  %vm329 = vcmp.lt.s32.totalorder %v31, 32
  %v330 = vsel %vm329, %v323, 0.0
  %v331 = vsel %vm329, %v326, 0.0
  %332 = vrot.lane.b32.xlu0 %v330, 32
  %v333 = vpop.permute.xlu0 %332
  %334 = vrot.lane.b32.xlu0 %v331, 32
  %v335 = vpop.permute.xlu0 %334
  %v336 = vpack.c.bf16 %v331, %v330
  %v337 = vpack.c.bf16 %v335, %v333
  %vm338 = vcmask 261120
  %v340 = vsel %vm338, %v39, 0
  %342 = vmatprep.subr.bf16.mxu0 0
  %343 = vmatpush1.bf16.msra.mxu0 %v336
  %344 = vmatprep.subr.bf16.mxu0 0
  %345 = vmatpush1.bf16.msra.mxu0 %v337
  %346 = vmatprep.subr.bf16.mxu0 0
  %347 = vmatpush1.bf16.msra.mxu0 0
  %348 = vmatprep.subr.bf16.mxu0 0
  %349 = vmatpush1.bf16.msra.mxu0 0
  %350 = vmatprep.subr.bf16.mxu0 0
  %351 = vmatpush1.bf16.msra.mxu0 0
  %352 = vmatprep.subr.bf16.mxu0 0
  %353 = vmatpush1.bf16.msra.mxu0 0
  %354 = vmatprep.subr.bf16.mxu0 0
  %355 = vmatpush1.bf16.msra.mxu0 0
  %356 = vmatprep.subr.bf16.mxu0 0
  %357 = vmatpush1.bf16.msra.mxu0 0
  %358 = vmatprep.subr.bf16.mxu0 0
  %359 = vmatpush1.bf16.msra.mxu0 0
  %360 = vmatprep.subr.bf16.mxu0 0
  %361 = vmatpush1.bf16.msra.mxu0 0
  %362 = vmatprep.subr.bf16.mxu0 0
  %363 = vmatpush1.bf16.msra.mxu0 0
  %364 = vmatprep.subr.bf16.mxu0 0
  %365 = vmatpush1.bf16.msra.mxu0 0
  %366 = vmatprep.subr.bf16.mxu0 0
  %367 = vmatpush1.bf16.msra.mxu0 0
  %368 = vmatprep.subr.bf16.mxu0 0
  %369 = vmatpush1.bf16.msra.mxu0 0
  %370 = vmatprep.subr.bf16.mxu0 0
  %371 = vmatpush1.bf16.msra.mxu0 0
  %372 = vmatprep.subr.bf16.mxu0 0
  %373 = vmatpush1.bf16.msra.mxu0 0
  %374 = vmatprep.mubr.bf16.mxu0 0
  %375 = vmatmul.mubr.bf16.gmra.mrb[0].mxu0 %v340
  %v376 = vpop.f32.mrb[0].mxu0
  %v377 = vadd.f32 0.0, %v376
  %v378 = vpop.f32.mrb[0].mxu0
  %v379 = vpop.f32.mrb[0].mxu0
  %v380 = vpop.f32.mrb[0].mxu0
  %381 = vdwg.mxu0
  %v382 = vpack.c.bf16 %v377, %v377
  %s383 = scalar_lea.vmem %s4, 128
  %v384 = vld [vmem:[%s383] sm:$0xf]
  %v385 = vld [vmem:[%s383 + $0x4] sm:$0xf]
  %v386 = vld [vmem:[%s383 + $0x8] sm:$0xf]
  %v387 = vld [vmem:[%s383 + $0xc] sm:$0xf]
  %v388 = vld [vmem:[%s383 + $0x10] sm:$0xf]
  %v389 = vld [vmem:[%s383 + $0x14] sm:$0xf]
  %v390 = vld [vmem:[%s383 + $0x18] sm:$0xf]
  %v391 = vld [vmem:[%s383 + $0x1c] sm:$0xf]
  %v392 = vld [vmem:[%s383 + $0x20] sm:$0xf]
  %v393 = vld [vmem:[%s383 + $0x24] sm:$0xf]
  %v394 = vld [vmem:[%s383 + $0x28] sm:$0xf]
  %v395 = vld [vmem:[%s383 + $0x2c] sm:$0xf]
  %v396 = vld [vmem:[%s383 + $0x30] sm:$0xf]
  %v397 = vld [vmem:[%s383 + $0x34] sm:$0xf]
  %v398 = vld [vmem:[%s383 + $0x38] sm:$0xf]
  %v399 = vld [vmem:[%s383 + $0x3c] sm:$0xf]
  %s400 = scalar_lea.vmem %s5, 2
  %v401 = vld [vmem:[%s400] sm:$0x1]
  %v403 = vlaneseq
  %v404 = vshrl.u32 %v403, 7
  %v405 = vsub.s32 0, %v404
  %v406 = vrot.slane %v401, %v405
  %v424 = vunpack.c.l.b16 %v384
  %v425 = vunpack.c.l.b16 %v385
  %v426 = vunpack.c.l.b16 %v386
  %v427 = vunpack.c.l.b16 %v387
  %v428 = vunpack.c.l.b16 %v388
  %v429 = vunpack.c.l.b16 %v389
  %v430 = vunpack.c.l.b16 %v390
  %v431 = vunpack.c.l.b16 %v391
  %v432 = vunpack.c.l.b16 %v392
  %v433 = vunpack.c.l.b16 %v393
  %v434 = vunpack.c.l.b16 %v394
  %v435 = vunpack.c.l.b16 %v395
  %v436 = vunpack.c.l.b16 %v396
  %v437 = vunpack.c.l.b16 %v397
  %v438 = vunpack.c.l.b16 %v398
  %v439 = vunpack.c.l.b16 %v399
  %v440 = vpack.c.b16 %v425, %v424
  %v441 = vpack.c.b16 %v427, %v426
  %v442 = vpack.c.b16 %v429, %v428
  %v443 = vpack.c.b16 %v431, %v430
  %v444 = vpack.c.b16 %v433, %v432
  %v445 = vpack.c.b16 %v435, %v434
  %v446 = vpack.c.b16 %v437, %v436
  %v447 = vpack.c.b16 %v439, %v438
  %456 = vmatprep.subr.bf16.mxu0 0
  %457 = vmatpush1.bf16.msra.mxu0 %v440
  %458 = vmatprep.subr.bf16.mxu0 0
  %459 = vmatpush1.bf16.msra.mxu0 %v441
  %460 = vmatprep.subr.bf16.mxu0 0
  %461 = vmatpush1.bf16.msra.mxu0 %v442
  %462 = vmatprep.subr.bf16.mxu0 0
  %463 = vmatpush1.bf16.msra.mxu0 %v443
  %464 = vmatprep.subr.bf16.mxu0 0
  %465 = vmatpush1.bf16.msra.mxu0 %v444
  %466 = vmatprep.subr.bf16.mxu0 0
  %467 = vmatpush1.bf16.msra.mxu0 %v445
  %468 = vmatprep.subr.bf16.mxu0 0
  %469 = vmatpush1.bf16.msra.mxu0 %v446
  %470 = vmatprep.subr.bf16.mxu0 0
  %471 = vmatpush1.bf16.msra.mxu0 %v447
  %472 = vmatprep.subr.bf16.mxu0 0
  %473 = vmatpush1.bf16.msra.mxu0 0
  %474 = vmatprep.subr.bf16.mxu0 0
  %475 = vmatpush1.bf16.msra.mxu0 0
  %476 = vmatprep.subr.bf16.mxu0 0
  %477 = vmatpush1.bf16.msra.mxu0 0
  %478 = vmatprep.subr.bf16.mxu0 0
  %479 = vmatpush1.bf16.msra.mxu0 0
  %480 = vmatprep.subr.bf16.mxu0 0
  %481 = vmatpush1.bf16.msra.mxu0 0
  %482 = vmatprep.subr.bf16.mxu0 0
  %483 = vmatpush1.bf16.msra.mxu0 0
  %484 = vmatprep.subr.bf16.mxu0 0
  %485 = vmatpush1.bf16.msra.mxu0 0
  %486 = vmatprep.subr.bf16.mxu0 0
  %487 = vmatpush1.bf16.msra.mxu0 0
  %488 = vmatprep.mubr.bf16.mxu0 0
  %489 = vmatmul.mubr.bf16.gmra.mrb[0].mxu0 %v382
  %v490 = vpop.f32.mrb[0].mxu0
  %v491 = vadd.f32 %v406, %v490
  %v492 = vpop.f32.mrb[0].mxu0
  %v493 = vpop.f32.mrb[0].mxu0
  %v494 = vpop.f32.mrb[0].mxu0
  %495 = vdwg.mxu0
  %v496 = vmax.f32 %v491, 0.0
  %v497 = vpack.c.bf16 %v496, %v496
  %s498 = scalar_lea.vmem %s6, 128
  %v499 = vld [vmem:[%s498] sm:$0xf]
  %v500 = vld [vmem:[%s498 + $0x4] sm:$0xf]
  %v501 = vld [vmem:[%s498 + $0x8] sm:$0xf]
  %v502 = vld [vmem:[%s498 + $0xc] sm:$0xf]
  %v503 = vld [vmem:[%s498 + $0x10] sm:$0xf]
  %v504 = vld [vmem:[%s498 + $0x14] sm:$0xf]
  %v505 = vld [vmem:[%s498 + $0x18] sm:$0xf]
  %v506 = vld [vmem:[%s498 + $0x1c] sm:$0xf]
  %v507 = vld [vmem:[%s498 + $0x20] sm:$0xf]
  %v508 = vld [vmem:[%s498 + $0x24] sm:$0xf]
  %v509 = vld [vmem:[%s498 + $0x28] sm:$0xf]
  %v510 = vld [vmem:[%s498 + $0x2c] sm:$0xf]
  %v511 = vld [vmem:[%s498 + $0x30] sm:$0xf]
  %v512 = vld [vmem:[%s498 + $0x34] sm:$0xf]
  %v513 = vld [vmem:[%s498 + $0x38] sm:$0xf]
  %v514 = vld [vmem:[%s498 + $0x3c] sm:$0xf]
  %s515 = scalar_lea.vmem %s7, 2
  %v516 = vld [vmem:[%s515] sm:$0x1]
  %v518 = vlaneseq
  %v519 = vshrl.u32 %v518, 7
  %v520 = vsub.s32 0, %v519
  %v521 = vrot.slane %v516, %v520
  %v539 = vunpack.c.l.b16 %v499
  %v540 = vunpack.c.l.b16 %v500
  %v541 = vunpack.c.l.b16 %v501
  %v542 = vunpack.c.l.b16 %v502
  %v543 = vunpack.c.l.b16 %v503
  %v544 = vunpack.c.l.b16 %v504
  %v545 = vunpack.c.l.b16 %v505
  %v546 = vunpack.c.l.b16 %v506
  %v547 = vunpack.c.l.b16 %v507
  %v548 = vunpack.c.l.b16 %v508
  %v549 = vunpack.c.l.b16 %v509
  %v550 = vunpack.c.l.b16 %v510
  %v551 = vunpack.c.l.b16 %v511
  %v552 = vunpack.c.l.b16 %v512
  %v553 = vunpack.c.l.b16 %v513
  %v554 = vunpack.c.l.b16 %v514
  %v555 = vpack.c.b16 %v540, %v539
  %v556 = vpack.c.b16 %v542, %v541
  %v557 = vpack.c.b16 %v544, %v543
  %v558 = vpack.c.b16 %v546, %v545
  %v559 = vpack.c.b16 %v548, %v547
  %v560 = vpack.c.b16 %v550, %v549
  %v561 = vpack.c.b16 %v552, %v551
  %v562 = vpack.c.b16 %v554, %v553
  %571 = vmatprep.subr.bf16.mxu0 0
  %572 = vmatpush1.bf16.msra.mxu0 %v555
  %573 = vmatprep.subr.bf16.mxu0 0
  %574 = vmatpush1.bf16.msra.mxu0 %v556
  %575 = vmatprep.subr.bf16.mxu0 0
  %576 = vmatpush1.bf16.msra.mxu0 %v557
  %577 = vmatprep.subr.bf16.mxu0 0
  %578 = vmatpush1.bf16.msra.mxu0 %v558
  %579 = vmatprep.subr.bf16.mxu0 0
  %580 = vmatpush1.bf16.msra.mxu0 %v559
  %581 = vmatprep.subr.bf16.mxu0 0
  %582 = vmatpush1.bf16.msra.mxu0 %v560
  %583 = vmatprep.subr.bf16.mxu0 0
  %584 = vmatpush1.bf16.msra.mxu0 %v561
  %585 = vmatprep.subr.bf16.mxu0 0
  %586 = vmatpush1.bf16.msra.mxu0 %v562
  %587 = vmatprep.subr.bf16.mxu0 0
  %588 = vmatpush1.bf16.msra.mxu0 0
  %589 = vmatprep.subr.bf16.mxu0 0
  %590 = vmatpush1.bf16.msra.mxu0 0
  %591 = vmatprep.subr.bf16.mxu0 0
  %592 = vmatpush1.bf16.msra.mxu0 0
  %593 = vmatprep.subr.bf16.mxu0 0
  %594 = vmatpush1.bf16.msra.mxu0 0
  %595 = vmatprep.subr.bf16.mxu0 0
  %596 = vmatpush1.bf16.msra.mxu0 0
  %597 = vmatprep.subr.bf16.mxu0 0
  %598 = vmatpush1.bf16.msra.mxu0 0
  %599 = vmatprep.subr.bf16.mxu0 0
  %600 = vmatpush1.bf16.msra.mxu0 0
  %601 = vmatprep.subr.bf16.mxu0 0
  %602 = vmatpush1.bf16.msra.mxu0 0
  %603 = vmatprep.mubr.bf16.mxu0 0
  %604 = vmatmul.mubr.bf16.gmra.mrb[0].mxu0 %v497
  %v605 = vpop.f32.mrb[0].mxu0
  %v606 = vadd.f32 %v521, %v605
  %v607 = vpop.f32.mrb[0].mxu0
  %v608 = vpop.f32.mrb[0].mxu0
  %v609 = vpop.f32.mrb[0].mxu0
  %610 = vdwg.mxu0
  %v611 = vsel %vm329, %v606, 0.0
  %612 = vrot.lane.b32.xlu0 %v606, 96
  %v613 = vpop.permute.xlu0 %612
  %v614 = vsel %vm329, %v613, 0.0
  %v615 = vpack.c.bf16 %v614, %v611
  %v617 = vsel %vm338, %v45, 0
  %619 = vmatprep.subr.bf16.mxu0 0
  %620 = vmatpush1.bf16.msra.mxu0 %v336
  %621 = vmatprep.subr.bf16.mxu0 0
  %622 = vmatpush1.bf16.msra.mxu0 %v337
  %623 = vmatprep.subr.bf16.mxu0 0
  %624 = vmatpush1.bf16.msra.mxu0 0
  %625 = vmatprep.subr.bf16.mxu0 0
  %626 = vmatpush1.bf16.msra.mxu0 0
  %627 = vmatprep.subr.bf16.mxu0 0
  %628 = vmatpush1.bf16.msra.mxu0 0
  %629 = vmatprep.subr.bf16.mxu0 0
  %630 = vmatpush1.bf16.msra.mxu0 0
  %631 = vmatprep.subr.bf16.mxu0 0
  %632 = vmatpush1.bf16.msra.mxu0 0
  %633 = vmatprep.subr.bf16.mxu0 0
  %634 = vmatpush1.bf16.msra.mxu0 0
  %635 = vmatprep.subr.bf16.mxu0 0
  %636 = vmatpush1.bf16.msra.mxu0 0
  %637 = vmatprep.subr.bf16.mxu0 0
  %638 = vmatpush1.bf16.msra.mxu0 0
  %639 = vmatprep.subr.bf16.mxu0 0
  %640 = vmatpush1.bf16.msra.mxu0 0
  %641 = vmatprep.subr.bf16.mxu0 0
  %642 = vmatpush1.bf16.msra.mxu0 0
  %643 = vmatprep.subr.bf16.mxu0 0
  %644 = vmatpush1.bf16.msra.mxu0 0
  %645 = vmatprep.subr.bf16.mxu0 0
  %646 = vmatpush1.bf16.msra.mxu0 0
  %647 = vmatprep.subr.bf16.mxu0 0
  %648 = vmatpush1.bf16.msra.mxu0 0
  %649 = vmatprep.subr.bf16.mxu0 0
  %650 = vmatpush1.bf16.msra.mxu0 0
  %651 = vmatprep.mubr.bf16.mxu0 0
  %652 = vmatmul.mubr.bf16.gmra.mrb[0].mxu0 %v617
  %v653 = vpop.f32.mrb[0].mxu0
  %v654 = vadd.f32 0.0, %v653
  %v655 = vpop.f32.mrb[0].mxu0
  %v656 = vpop.f32.mrb[0].mxu0
  %v657 = vpop.f32.mrb[0].mxu0
  %658 = vdwg.mxu0
  %v659 = vpack.c.bf16 %v654, %v654
  %s660 = scalar_lea.vmem %s4, 192
  %v661 = vld [vmem:[%s660] sm:$0xf]
  %v662 = vld [vmem:[%s660 + $0x4] sm:$0xf]
  %v663 = vld [vmem:[%s660 + $0x8] sm:$0xf]
  %v664 = vld [vmem:[%s660 + $0xc] sm:$0xf]
  %v665 = vld [vmem:[%s660 + $0x10] sm:$0xf]
  %v666 = vld [vmem:[%s660 + $0x14] sm:$0xf]
  %v667 = vld [vmem:[%s660 + $0x18] sm:$0xf]
  %v668 = vld [vmem:[%s660 + $0x1c] sm:$0xf]
  %v669 = vld [vmem:[%s660 + $0x20] sm:$0xf]
  %v670 = vld [vmem:[%s660 + $0x24] sm:$0xf]
  %v671 = vld [vmem:[%s660 + $0x28] sm:$0xf]
  %v672 = vld [vmem:[%s660 + $0x2c] sm:$0xf]
  %v673 = vld [vmem:[%s660 + $0x30] sm:$0xf]
  %v674 = vld [vmem:[%s660 + $0x34] sm:$0xf]
  %v675 = vld [vmem:[%s660 + $0x38] sm:$0xf]
  %v676 = vld [vmem:[%s660 + $0x3c] sm:$0xf]
  %s677 = scalar_lea.vmem %s5, 3
  %v678 = vld [vmem:[%s677] sm:$0x1]
  %v680 = vlaneseq
  %v681 = vshrl.u32 %v680, 7
  %v682 = vsub.s32 0, %v681
  %v683 = vrot.slane %v678, %v682
  %v701 = vunpack.c.l.b16 %v661
  %v702 = vunpack.c.l.b16 %v662
  %v703 = vunpack.c.l.b16 %v663
  %v704 = vunpack.c.l.b16 %v664
  %v705 = vunpack.c.l.b16 %v665
  %v706 = vunpack.c.l.b16 %v666
  %v707 = vunpack.c.l.b16 %v667
  %v708 = vunpack.c.l.b16 %v668
  %v709 = vunpack.c.l.b16 %v669
  %v710 = vunpack.c.l.b16 %v670
  %v711 = vunpack.c.l.b16 %v671
  %v712 = vunpack.c.l.b16 %v672
  %v713 = vunpack.c.l.b16 %v673
  %v714 = vunpack.c.l.b16 %v674
  %v715 = vunpack.c.l.b16 %v675
  %v716 = vunpack.c.l.b16 %v676
  %v717 = vpack.c.b16 %v702, %v701
  %v718 = vpack.c.b16 %v704, %v703
  %v719 = vpack.c.b16 %v706, %v705
  %v720 = vpack.c.b16 %v708, %v707
  %v721 = vpack.c.b16 %v710, %v709
  %v722 = vpack.c.b16 %v712, %v711
  %v723 = vpack.c.b16 %v714, %v713
  %v724 = vpack.c.b16 %v716, %v715
  %733 = vmatprep.subr.bf16.mxu0 0
  %734 = vmatpush1.bf16.msra.mxu0 %v717
  %735 = vmatprep.subr.bf16.mxu0 0
  %736 = vmatpush1.bf16.msra.mxu0 %v718
  %737 = vmatprep.subr.bf16.mxu0 0
  %738 = vmatpush1.bf16.msra.mxu0 %v719
  %739 = vmatprep.subr.bf16.mxu0 0
  %740 = vmatpush1.bf16.msra.mxu0 %v720
  %741 = vmatprep.subr.bf16.mxu0 0
  %742 = vmatpush1.bf16.msra.mxu0 %v721
  %743 = vmatprep.subr.bf16.mxu0 0
  %744 = vmatpush1.bf16.msra.mxu0 %v722
  %745 = vmatprep.subr.bf16.mxu0 0
  %746 = vmatpush1.bf16.msra.mxu0 %v723
  %747 = vmatprep.subr.bf16.mxu0 0
  %748 = vmatpush1.bf16.msra.mxu0 %v724
  %749 = vmatprep.subr.bf16.mxu0 0
  %750 = vmatpush1.bf16.msra.mxu0 0
  %751 = vmatprep.subr.bf16.mxu0 0
  %752 = vmatpush1.bf16.msra.mxu0 0
  %753 = vmatprep.subr.bf16.mxu0 0
  %754 = vmatpush1.bf16.msra.mxu0 0
  %755 = vmatprep.subr.bf16.mxu0 0
  %756 = vmatpush1.bf16.msra.mxu0 0
  %757 = vmatprep.subr.bf16.mxu0 0
  %758 = vmatpush1.bf16.msra.mxu0 0
  %759 = vmatprep.subr.bf16.mxu0 0
  %760 = vmatpush1.bf16.msra.mxu0 0
  %761 = vmatprep.subr.bf16.mxu0 0
  %762 = vmatpush1.bf16.msra.mxu0 0
  %763 = vmatprep.subr.bf16.mxu0 0
  %764 = vmatpush1.bf16.msra.mxu0 0
  %765 = vmatprep.mubr.bf16.mxu0 0
  %766 = vmatmul.mubr.bf16.gmra.mrb[0].mxu0 %v659
  %v767 = vpop.f32.mrb[0].mxu0
  %v768 = vadd.f32 %v683, %v767
  %v769 = vpop.f32.mrb[0].mxu0
  %v770 = vpop.f32.mrb[0].mxu0
  %v771 = vpop.f32.mrb[0].mxu0
  %772 = vdwg.mxu0
  %v773 = vmax.f32 %v768, 0.0
  %v774 = vpack.c.bf16 %v773, %v773
  %s775 = scalar_lea.vmem %s6, 192
  %v776 = vld [vmem:[%s775] sm:$0xf]
  %v777 = vld [vmem:[%s775 + $0x4] sm:$0xf]
  %v778 = vld [vmem:[%s775 + $0x8] sm:$0xf]
  %v779 = vld [vmem:[%s775 + $0xc] sm:$0xf]
  %v780 = vld [vmem:[%s775 + $0x10] sm:$0xf]
  %v781 = vld [vmem:[%s775 + $0x14] sm:$0xf]
  %v782 = vld [vmem:[%s775 + $0x18] sm:$0xf]
  %v783 = vld [vmem:[%s775 + $0x1c] sm:$0xf]
  %v784 = vld [vmem:[%s775 + $0x20] sm:$0xf]
  %v785 = vld [vmem:[%s775 + $0x24] sm:$0xf]
  %v786 = vld [vmem:[%s775 + $0x28] sm:$0xf]
  %v787 = vld [vmem:[%s775 + $0x2c] sm:$0xf]
  %v788 = vld [vmem:[%s775 + $0x30] sm:$0xf]
  %v789 = vld [vmem:[%s775 + $0x34] sm:$0xf]
  %v790 = vld [vmem:[%s775 + $0x38] sm:$0xf]
  %v791 = vld [vmem:[%s775 + $0x3c] sm:$0xf]
  %s792 = scalar_lea.vmem %s7, 3
  %v793 = vld [vmem:[%s792] sm:$0x1]
  %v795 = vlaneseq
  %v796 = vshrl.u32 %v795, 7
  %v797 = vsub.s32 0, %v796
  %v798 = vrot.slane %v793, %v797
  %v816 = vunpack.c.l.b16 %v776
  %v817 = vunpack.c.l.b16 %v777
  %v818 = vunpack.c.l.b16 %v778
  %v819 = vunpack.c.l.b16 %v779
  %v820 = vunpack.c.l.b16 %v780
  %v821 = vunpack.c.l.b16 %v781
  %v822 = vunpack.c.l.b16 %v782
  %v823 = vunpack.c.l.b16 %v783
  %v824 = vunpack.c.l.b16 %v784
  %v825 = vunpack.c.l.b16 %v785
  %v826 = vunpack.c.l.b16 %v786
  %v827 = vunpack.c.l.b16 %v787
  %v828 = vunpack.c.l.b16 %v788
  %v829 = vunpack.c.l.b16 %v789
  %v830 = vunpack.c.l.b16 %v790
  %v831 = vunpack.c.l.b16 %v791
  %v832 = vpack.c.b16 %v817, %v816
  %v833 = vpack.c.b16 %v819, %v818
  %v834 = vpack.c.b16 %v821, %v820
  %v835 = vpack.c.b16 %v823, %v822
  %v836 = vpack.c.b16 %v825, %v824
  %v837 = vpack.c.b16 %v827, %v826
  %v838 = vpack.c.b16 %v829, %v828
  %v839 = vpack.c.b16 %v831, %v830
  %848 = vmatprep.subr.bf16.mxu0 0
  %849 = vmatpush1.bf16.msra.mxu0 %v832
  %850 = vmatprep.subr.bf16.mxu0 0
  %851 = vmatpush1.bf16.msra.mxu0 %v833
  %852 = vmatprep.subr.bf16.mxu0 0
  %853 = vmatpush1.bf16.msra.mxu0 %v834
  %854 = vmatprep.subr.bf16.mxu0 0
  %855 = vmatpush1.bf16.msra.mxu0 %v835
  %856 = vmatprep.subr.bf16.mxu0 0
  %857 = vmatpush1.bf16.msra.mxu0 %v836
  %858 = vmatprep.subr.bf16.mxu0 0
  %859 = vmatpush1.bf16.msra.mxu0 %v837
  %860 = vmatprep.subr.bf16.mxu0 0
  %861 = vmatpush1.bf16.msra.mxu0 %v838
  %862 = vmatprep.subr.bf16.mxu0 0
  %863 = vmatpush1.bf16.msra.mxu0 %v839
  %864 = vmatprep.subr.bf16.mxu0 0
  %865 = vmatpush1.bf16.msra.mxu0 0
  %866 = vmatprep.subr.bf16.mxu0 0
  %867 = vmatpush1.bf16.msra.mxu0 0
  %868 = vmatprep.subr.bf16.mxu0 0
  %869 = vmatpush1.bf16.msra.mxu0 0
  %870 = vmatprep.subr.bf16.mxu0 0
  %871 = vmatpush1.bf16.msra.mxu0 0
  %872 = vmatprep.subr.bf16.mxu0 0
  %873 = vmatpush1.bf16.msra.mxu0 0
  %874 = vmatprep.subr.bf16.mxu0 0
  %875 = vmatpush1.bf16.msra.mxu0 0
  %876 = vmatprep.subr.bf16.mxu0 0
  %877 = vmatpush1.bf16.msra.mxu0 0
  %878 = vmatprep.subr.bf16.mxu0 0
  %879 = vmatpush1.bf16.msra.mxu0 0
  %880 = vmatprep.mubr.bf16.mxu0 0
  %881 = vmatmul.mubr.bf16.gmra.mrb[0].mxu0 %v774
  %v882 = vpop.f32.mrb[0].mxu0
  %v883 = vadd.f32 %v798, %v882
  %v884 = vpop.f32.mrb[0].mxu0
  %v885 = vpop.f32.mrb[0].mxu0
  %v886 = vpop.f32.mrb[0].mxu0
  %887 = vdwg.mxu0
  %v888 = vsel %vm329, %v883, 0.0
  %889 = vrot.lane.b32.xlu0 %v883, 96
  %v890 = vpop.permute.xlu0 %889
  %v891 = vsel %vm329, %v890, 0.0
  %v892 = vpack.c.bf16 %v891, %v888
  %vm893 = vcmask 130048
  %v895 = vsel %vm893, %v76, 0
  %897 = vmatprep.subr.bf16.mxu0 0
  %898 = vmatpush1.bf16.msra.mxu0 %v892
  %899 = vmatprep.subr.bf16.mxu0 0
  %900 = vmatpush1.bf16.msra.mxu0 0
  %901 = vmatprep.subr.bf16.mxu0 0
  %902 = vmatpush1.bf16.msra.mxu0 0
  %903 = vmatprep.subr.bf16.mxu0 0
  %904 = vmatpush1.bf16.msra.mxu0 0
  %905 = vmatprep.subr.bf16.mxu0 0
  %906 = vmatpush1.bf16.msra.mxu0 0
  %907 = vmatprep.subr.bf16.mxu0 0
  %908 = vmatpush1.bf16.msra.mxu0 0
  %909 = vmatprep.subr.bf16.mxu0 0
  %910 = vmatpush1.bf16.msra.mxu0 0
  %911 = vmatprep.subr.bf16.mxu0 0
  %912 = vmatpush1.bf16.msra.mxu0 0
  %913 = vmatprep.subr.bf16.mxu0 0
  %914 = vmatpush1.bf16.msra.mxu0 0
  %915 = vmatprep.subr.bf16.mxu0 0
  %916 = vmatpush1.bf16.msra.mxu0 0
  %917 = vmatprep.subr.bf16.mxu0 0
  %918 = vmatpush1.bf16.msra.mxu0 0
  %919 = vmatprep.subr.bf16.mxu0 0
  %920 = vmatpush1.bf16.msra.mxu0 0
  %921 = vmatprep.subr.bf16.mxu0 0
  %922 = vmatpush1.bf16.msra.mxu0 0
  %923 = vmatprep.subr.bf16.mxu0 0
  %924 = vmatpush1.bf16.msra.mxu0 0
  %925 = vmatprep.subr.bf16.mxu0 0
  %926 = vmatpush1.bf16.msra.mxu0 0
  %927 = vmatprep.subr.bf16.mxu0 0
  %928 = vmatpush1.bf16.msra.mxu0 0
  %929 = vmatprep.mubr.bf16.mxu0 0
  %930 = vmatmul.mubr.bf16.gmra.mrb[0].mxu0 %v895
  %v931 = vpop.f32.mrb[0].mxu0
  %v932 = vadd.f32 0.0, %v931
  %v933 = vpop.f32.mrb[0].mxu0
  %v934 = vpop.f32.mrb[0].mxu0
  %v935 = vadd.f32 0.0, %v934
  %v936 = vpop.f32.mrb[0].mxu0
  %937 = vdwg.mxu0
  %v939 = vsel %vm893, %v63, 0
  %941 = vmatprep.subr.bf16.mxu0 0
  %942 = vmatpush1.bf16.msra.mxu0 %v615
  %943 = vmatprep.subr.bf16.mxu0 0
  %944 = vmatpush1.bf16.msra.mxu0 0
  %945 = vmatprep.subr.bf16.mxu0 0
  %946 = vmatpush1.bf16.msra.mxu0 0
  %947 = vmatprep.subr.bf16.mxu0 0
  %948 = vmatpush1.bf16.msra.mxu0 0
  %949 = vmatprep.subr.bf16.mxu0 0
  %950 = vmatpush1.bf16.msra.mxu0 0
  %951 = vmatprep.subr.bf16.mxu0 0
  %952 = vmatpush1.bf16.msra.mxu0 0
  %953 = vmatprep.subr.bf16.mxu0 0
  %954 = vmatpush1.bf16.msra.mxu0 0
  %955 = vmatprep.subr.bf16.mxu0 0
  %956 = vmatpush1.bf16.msra.mxu0 0
  %957 = vmatprep.subr.bf16.mxu0 0
  %958 = vmatpush1.bf16.msra.mxu0 0
  %959 = vmatprep.subr.bf16.mxu0 0
  %960 = vmatpush1.bf16.msra.mxu0 0
  %961 = vmatprep.subr.bf16.mxu0 0
  %962 = vmatpush1.bf16.msra.mxu0 0
  %963 = vmatprep.subr.bf16.mxu0 0
  %964 = vmatpush1.bf16.msra.mxu0 0
  %965 = vmatprep.subr.bf16.mxu0 0
  %966 = vmatpush1.bf16.msra.mxu0 0
  %967 = vmatprep.subr.bf16.mxu0 0
  %968 = vmatpush1.bf16.msra.mxu0 0
  %969 = vmatprep.subr.bf16.mxu0 0
  %970 = vmatpush1.bf16.msra.mxu0 0
  %971 = vmatprep.subr.bf16.mxu0 0
  %972 = vmatpush1.bf16.msra.mxu0 0
  %973 = vmatprep.mubr.bf16.mxu0 0
  %974 = vmatmul.mubr.bf16.gmra.mrb[0].mxu0 %v939
  %v975 = vpop.f32.mrb[0].mxu0
  %v976 = vadd.f32 %v932, %v975
  %v977 = vpop.f32.mrb[0].mxu0
  %v978 = vpop.f32.mrb[0].mxu0
  %v979 = vadd.f32 %v935, %v978
  %v980 = vpop.f32.mrb[0].mxu0
  %981 = vdwg.mxu0
  %v983 = vsel %vm338, %v51, 0
  %985 = vmatprep.subr.bf16.mxu0 0
  %986 = vmatpush1.bf16.msra.mxu0 %v336
  %987 = vmatprep.subr.bf16.mxu0 0
  %988 = vmatpush1.bf16.msra.mxu0 %v337
  %989 = vmatprep.subr.bf16.mxu0 0
  %990 = vmatpush1.bf16.msra.mxu0 0
  %991 = vmatprep.subr.bf16.mxu0 0
  %992 = vmatpush1.bf16.msra.mxu0 0
  %993 = vmatprep.subr.bf16.mxu0 0
  %994 = vmatpush1.bf16.msra.mxu0 0
  %995 = vmatprep.subr.bf16.mxu0 0
  %996 = vmatpush1.bf16.msra.mxu0 0
  %997 = vmatprep.subr.bf16.mxu0 0
  %998 = vmatpush1.bf16.msra.mxu0 0
  %999 = vmatprep.subr.bf16.mxu0 0
  %1000 = vmatpush1.bf16.msra.mxu0 0
  %1001 = vmatprep.subr.bf16.mxu0 0
  %1002 = vmatpush1.bf16.msra.mxu0 0
  %1003 = vmatprep.subr.bf16.mxu0 0
  %1004 = vmatpush1.bf16.msra.mxu0 0
  %1005 = vmatprep.subr.bf16.mxu0 0
  %1006 = vmatpush1.bf16.msra.mxu0 0
  %1007 = vmatprep.subr.bf16.mxu0 0
  %1008 = vmatpush1.bf16.msra.mxu0 0
  %1009 = vmatprep.subr.bf16.mxu0 0
  %1010 = vmatpush1.bf16.msra.mxu0 0
  %1011 = vmatprep.subr.bf16.mxu0 0
  %1012 = vmatpush1.bf16.msra.mxu0 0
  %1013 = vmatprep.subr.bf16.mxu0 0
  %1014 = vmatpush1.bf16.msra.mxu0 0
  %1015 = vmatprep.subr.bf16.mxu0 0
  %1016 = vmatpush1.bf16.msra.mxu0 0
  %1017 = vmatprep.mubr.bf16.mxu0 0
  %1018 = vmatmul.mubr.bf16.gmra.mrb[0].mxu0 %v983
  %v1019 = vpop.f32.mrb[0].mxu0
  %v1020 = vadd.f32 0.0, %v1019
  %v1021 = vpop.f32.mrb[0].mxu0
  %v1022 = vpop.f32.mrb[0].mxu0
  %v1023 = vpop.f32.mrb[0].mxu0
  %1024 = vdwg.mxu0
  %v1025 = vpack.c.bf16 %v1020, %v1020
  %s1026 = scalar_lea.vmem %s4, 256
  %v1027 = vld [vmem:[%s1026] sm:$0xf]
  %v1028 = vld [vmem:[%s1026 + $0x4] sm:$0xf]
  %v1029 = vld [vmem:[%s1026 + $0x8] sm:$0xf]
  %v1030 = vld [vmem:[%s1026 + $0xc] sm:$0xf]
  %v1031 = vld [vmem:[%s1026 + $0x10] sm:$0xf]
  %v1032 = vld [vmem:[%s1026 + $0x14] sm:$0xf]
  %v1033 = vld [vmem:[%s1026 + $0x18] sm:$0xf]
  %v1034 = vld [vmem:[%s1026 + $0x1c] sm:$0xf]
  %v1035 = vld [vmem:[%s1026 + $0x20] sm:$0xf]
  %v1036 = vld [vmem:[%s1026 + $0x24] sm:$0xf]
  %v1037 = vld [vmem:[%s1026 + $0x28] sm:$0xf]
  %v1038 = vld [vmem:[%s1026 + $0x2c] sm:$0xf]
  %v1039 = vld [vmem:[%s1026 + $0x30] sm:$0xf]
  %v1040 = vld [vmem:[%s1026 + $0x34] sm:$0xf]
  %v1041 = vld [vmem:[%s1026 + $0x38] sm:$0xf]
  %v1042 = vld [vmem:[%s1026 + $0x3c] sm:$0xf]
  %s1043 = scalar_lea.vmem %s5, 4
  %v1044 = vld [vmem:[%s1043] sm:$0x1]
  %v1046 = vlaneseq
  %v1047 = vshrl.u32 %v1046, 7
  %v1048 = vsub.s32 0, %v1047
  %v1049 = vrot.slane %v1044, %v1048
  %v1067 = vunpack.c.l.b16 %v1027
  %v1068 = vunpack.c.l.b16 %v1028
  %v1069 = vunpack.c.l.b16 %v1029
  %v1070 = vunpack.c.l.b16 %v1030
  %v1071 = vunpack.c.l.b16 %v1031
  %v1072 = vunpack.c.l.b16 %v1032
  %v1073 = vunpack.c.l.b16 %v1033
  %v1074 = vunpack.c.l.b16 %v1034
  %v1075 = vunpack.c.l.b16 %v1035
  %v1076 = vunpack.c.l.b16 %v1036
  %v1077 = vunpack.c.l.b16 %v1037
  %v1078 = vunpack.c.l.b16 %v1038
  %v1079 = vunpack.c.l.b16 %v1039
  %v1080 = vunpack.c.l.b16 %v1040
  %v1081 = vunpack.c.l.b16 %v1041
  %v1082 = vunpack.c.l.b16 %v1042
  %v1083 = vpack.c.b16 %v1068, %v1067
  %v1084 = vpack.c.b16 %v1070, %v1069
  %v1085 = vpack.c.b16 %v1072, %v1071
  %v1086 = vpack.c.b16 %v1074, %v1073
  %v1087 = vpack.c.b16 %v1076, %v1075
  %v1088 = vpack.c.b16 %v1078, %v1077
  %v1089 = vpack.c.b16 %v1080, %v1079
  %v1090 = vpack.c.b16 %v1082, %v1081
  %1099 = vmatprep.subr.bf16.mxu0 0
  %1100 = vmatpush1.bf16.msra.mxu0 %v1083
  %1101 = vmatprep.subr.bf16.mxu0 0
  %1102 = vmatpush1.bf16.msra.mxu0 %v1084
  %1103 = vmatprep.subr.bf16.mxu0 0
  %1104 = vmatpush1.bf16.msra.mxu0 %v1085
  %1105 = vmatprep.subr.bf16.mxu0 0
  %1106 = vmatpush1.bf16.msra.mxu0 %v1086
  %1107 = vmatprep.subr.bf16.mxu0 0
  %1108 = vmatpush1.bf16.msra.mxu0 %v1087
  %1109 = vmatprep.subr.bf16.mxu0 0
  %1110 = vmatpush1.bf16.msra.mxu0 %v1088
  %1111 = vmatprep.subr.bf16.mxu0 0
  %1112 = vmatpush1.bf16.msra.mxu0 %v1089
  %1113 = vmatprep.subr.bf16.mxu0 0
  %1114 = vmatpush1.bf16.msra.mxu0 %v1090
  %1115 = vmatprep.subr.bf16.mxu0 0
  %1116 = vmatpush1.bf16.msra.mxu0 0
  %1117 = vmatprep.subr.bf16.mxu0 0
  %1118 = vmatpush1.bf16.msra.mxu0 0
  %1119 = vmatprep.subr.bf16.mxu0 0
  %1120 = vmatpush1.bf16.msra.mxu0 0
  %1121 = vmatprep.subr.bf16.mxu0 0
  %1122 = vmatpush1.bf16.msra.mxu0 0
  %1123 = vmatprep.subr.bf16.mxu0 0
  %1124 = vmatpush1.bf16.msra.mxu0 0
  %1125 = vmatprep.subr.bf16.mxu0 0
  %1126 = vmatpush1.bf16.msra.mxu0 0
  %1127 = vmatprep.subr.bf16.mxu0 0
  %1128 = vmatpush1.bf16.msra.mxu0 0
  %1129 = vmatprep.subr.bf16.mxu0 0
  %1130 = vmatpush1.bf16.msra.mxu0 0
  %1131 = vmatprep.mubr.bf16.mxu0 0
  %1132 = vmatmul.mubr.bf16.gmra.mrb[0].mxu0 %v1025
  %v1133 = vpop.f32.mrb[0].mxu0
  %v1134 = vadd.f32 %v1049, %v1133
  %v1135 = vpop.f32.mrb[0].mxu0
  %v1136 = vpop.f32.mrb[0].mxu0
  %v1137 = vpop.f32.mrb[0].mxu0
  %1138 = vdwg.mxu0
  %v1139 = vmax.f32 %v1134, 0.0
  %v1140 = vpack.c.bf16 %v1139, %v1139
  %s1141 = scalar_lea.vmem %s6, 256
  %v1142 = vld [vmem:[%s1141] sm:$0xf]
  %v1143 = vld [vmem:[%s1141 + $0x4] sm:$0xf]
  %v1144 = vld [vmem:[%s1141 + $0x8] sm:$0xf]
  %v1145 = vld [vmem:[%s1141 + $0xc] sm:$0xf]
  %v1146 = vld [vmem:[%s1141 + $0x10] sm:$0xf]
  %v1147 = vld [vmem:[%s1141 + $0x14] sm:$0xf]
  %v1148 = vld [vmem:[%s1141 + $0x18] sm:$0xf]
  %v1149 = vld [vmem:[%s1141 + $0x1c] sm:$0xf]
  %v1150 = vld [vmem:[%s1141 + $0x20] sm:$0xf]
  %v1151 = vld [vmem:[%s1141 + $0x24] sm:$0xf]
  %v1152 = vld [vmem:[%s1141 + $0x28] sm:$0xf]
  %v1153 = vld [vmem:[%s1141 + $0x2c] sm:$0xf]
  %v1154 = vld [vmem:[%s1141 + $0x30] sm:$0xf]
  %v1155 = vld [vmem:[%s1141 + $0x34] sm:$0xf]
  %v1156 = vld [vmem:[%s1141 + $0x38] sm:$0xf]
  %v1157 = vld [vmem:[%s1141 + $0x3c] sm:$0xf]
  %s1158 = scalar_lea.vmem %s7, 4
  %v1159 = vld [vmem:[%s1158] sm:$0x1]
  %v1161 = vlaneseq
  %v1162 = vshrl.u32 %v1161, 7
  %v1163 = vsub.s32 0, %v1162
  %v1164 = vrot.slane %v1159, %v1163
  %v1182 = vunpack.c.l.b16 %v1142
  %v1183 = vunpack.c.l.b16 %v1143
  %v1184 = vunpack.c.l.b16 %v1144
  %v1185 = vunpack.c.l.b16 %v1145
  %v1186 = vunpack.c.l.b16 %v1146
  %v1187 = vunpack.c.l.b16 %v1147
  %v1188 = vunpack.c.l.b16 %v1148
  %v1189 = vunpack.c.l.b16 %v1149
  %v1190 = vunpack.c.l.b16 %v1150
  %v1191 = vunpack.c.l.b16 %v1151
  %v1192 = vunpack.c.l.b16 %v1152
  %v1193 = vunpack.c.l.b16 %v1153
  %v1194 = vunpack.c.l.b16 %v1154
  %v1195 = vunpack.c.l.b16 %v1155
  %v1196 = vunpack.c.l.b16 %v1156
  %v1197 = vunpack.c.l.b16 %v1157
  %v1198 = vpack.c.b16 %v1183, %v1182
  %v1199 = vpack.c.b16 %v1185, %v1184
  %v1200 = vpack.c.b16 %v1187, %v1186
  %v1201 = vpack.c.b16 %v1189, %v1188
  %v1202 = vpack.c.b16 %v1191, %v1190
  %v1203 = vpack.c.b16 %v1193, %v1192
  %v1204 = vpack.c.b16 %v1195, %v1194
  %v1205 = vpack.c.b16 %v1197, %v1196
  %1214 = vmatprep.subr.bf16.mxu0 0
  %1215 = vmatpush1.bf16.msra.mxu0 %v1198
  %1216 = vmatprep.subr.bf16.mxu0 0
  %1217 = vmatpush1.bf16.msra.mxu0 %v1199
  %1218 = vmatprep.subr.bf16.mxu0 0
  %1219 = vmatpush1.bf16.msra.mxu0 %v1200
  %1220 = vmatprep.subr.bf16.mxu0 0
  %1221 = vmatpush1.bf16.msra.mxu0 %v1201
  %1222 = vmatprep.subr.bf16.mxu0 0
  %1223 = vmatpush1.bf16.msra.mxu0 %v1202
  %1224 = vmatprep.subr.bf16.mxu0 0
  %1225 = vmatpush1.bf16.msra.mxu0 %v1203
  %1226 = vmatprep.subr.bf16.mxu0 0
  %1227 = vmatpush1.bf16.msra.mxu0 %v1204
  %1228 = vmatprep.subr.bf16.mxu0 0
  %1229 = vmatpush1.bf16.msra.mxu0 %v1205
  %1230 = vmatprep.subr.bf16.mxu0 0
  %1231 = vmatpush1.bf16.msra.mxu0 0
  %1232 = vmatprep.subr.bf16.mxu0 0
  %1233 = vmatpush1.bf16.msra.mxu0 0
  %1234 = vmatprep.subr.bf16.mxu0 0
  %1235 = vmatpush1.bf16.msra.mxu0 0
  %1236 = vmatprep.subr.bf16.mxu0 0
  %1237 = vmatpush1.bf16.msra.mxu0 0
  %1238 = vmatprep.subr.bf16.mxu0 0
  %1239 = vmatpush1.bf16.msra.mxu0 0
  %1240 = vmatprep.subr.bf16.mxu0 0
  %1241 = vmatpush1.bf16.msra.mxu0 0
  %1242 = vmatprep.subr.bf16.mxu0 0
  %1243 = vmatpush1.bf16.msra.mxu0 0
  %1244 = vmatprep.subr.bf16.mxu0 0
  %1245 = vmatpush1.bf16.msra.mxu0 0
  %1246 = vmatprep.mubr.bf16.mxu0 0
  %1247 = vmatmul.mubr.bf16.gmra.mrb[0].mxu0 %v1140
  %v1248 = vpop.f32.mrb[0].mxu0
  %v1249 = vadd.f32 %v1164, %v1248
  %v1250 = vpop.f32.mrb[0].mxu0
  %v1251 = vpop.f32.mrb[0].mxu0
  %v1252 = vpop.f32.mrb[0].mxu0
  %1253 = vdwg.mxu0
  %v1254 = vsel %vm329, %v1249, 0.0
  %1255 = vrot.lane.b32.xlu0 %v1249, 96
  %v1256 = vpop.permute.xlu0 %1255
  %v1257 = vsel %vm329, %v1256, 0.0
  %v1258 = vpack.c.bf16 %v1257, %v1254
  %v1260 = vsel %vm893, %v89, 0
  %1262 = vmatprep.subr.bf16.mxu0 0
  %1263 = vmatpush1.bf16.msra.mxu0 %v1258
  %1264 = vmatprep.subr.bf16.mxu0 0
  %1265 = vmatpush1.bf16.msra.mxu0 0
  %1266 = vmatprep.subr.bf16.mxu0 0
  %1267 = vmatpush1.bf16.msra.mxu0 0
  %1268 = vmatprep.subr.bf16.mxu0 0
  %1269 = vmatpush1.bf16.msra.mxu0 0
  %1270 = vmatprep.subr.bf16.mxu0 0
  %1271 = vmatpush1.bf16.msra.mxu0 0
  %1272 = vmatprep.subr.bf16.mxu0 0
  %1273 = vmatpush1.bf16.msra.mxu0 0
  %1274 = vmatprep.subr.bf16.mxu0 0
  %1275 = vmatpush1.bf16.msra.mxu0 0
  %1276 = vmatprep.subr.bf16.mxu0 0
  %1277 = vmatpush1.bf16.msra.mxu0 0
  %1278 = vmatprep.subr.bf16.mxu0 0
  %1279 = vmatpush1.bf16.msra.mxu0 0
  %1280 = vmatprep.subr.bf16.mxu0 0
  %1281 = vmatpush1.bf16.msra.mxu0 0
  %1282 = vmatprep.subr.bf16.mxu0 0
  %1283 = vmatpush1.bf16.msra.mxu0 0
  %1284 = vmatprep.subr.bf16.mxu0 0
  %1285 = vmatpush1.bf16.msra.mxu0 0
  %1286 = vmatprep.subr.bf16.mxu0 0
  %1287 = vmatpush1.bf16.msra.mxu0 0
  %1288 = vmatprep.subr.bf16.mxu0 0
  %1289 = vmatpush1.bf16.msra.mxu0 0
  %1290 = vmatprep.subr.bf16.mxu0 0
  %1291 = vmatpush1.bf16.msra.mxu0 0
  %1292 = vmatprep.subr.bf16.mxu0 0
  %1293 = vmatpush1.bf16.msra.mxu0 0
  %1294 = vmatprep.mubr.bf16.mxu0 0
  %1295 = vmatmul.mubr.bf16.gmra.mrb[0].mxu0 %v1260
  %v1296 = vpop.f32.mrb[0].mxu0
  %v1297 = vadd.f32 0.0, %v1296
  %v1298 = vpop.f32.mrb[0].mxu0
  %v1299 = vpop.f32.mrb[0].mxu0
  %v1300 = vadd.f32 0.0, %v1299
  %v1301 = vpop.f32.mrb[0].mxu0
  %1302 = vdwg.mxu0
  %v1303 = vadd.f32 %v976, %v1297
  %v1304 = vadd.f32 %v979, %v1300
  %v1305 = vsel %vm329, %v1303, 0.0
  %v1306 = vsel %vm329, %v1304, 0.0
  %1307 = vrot.lane.b32.xlu0 %v1305, 32
  %v1308 = vpop.permute.xlu0 %1307
  %1309 = vrot.lane.b32.xlu0 %v1306, 32
  %v1310 = vpop.permute.xlu0 %1309
  %v1311 = vadd.f32 %v330, %v1308
  %v1312 = vadd.f32 %v331, %v1310
  %v1313 = vpack.c.bf16 %v1312, %v1311
  %s1314 = scalar_lea.vmem %s4, 64
  %v1315 = vld [vmem:[%s1314] sm:$0xf]
  %v1316 = vld [vmem:[%s1314 + $0x4] sm:$0xf]
  %v1317 = vld [vmem:[%s1314 + $0x8] sm:$0xf]
  %v1318 = vld [vmem:[%s1314 + $0xc] sm:$0xf]
  %v1319 = vld [vmem:[%s1314 + $0x10] sm:$0xf]
  %v1320 = vld [vmem:[%s1314 + $0x14] sm:$0xf]
  %v1321 = vld [vmem:[%s1314 + $0x18] sm:$0xf]
  %v1322 = vld [vmem:[%s1314 + $0x1c] sm:$0xf]
  %v1323 = vld [vmem:[%s1314 + $0x20] sm:$0xf]
  %v1324 = vld [vmem:[%s1314 + $0x24] sm:$0xf]
  %v1325 = vld [vmem:[%s1314 + $0x28] sm:$0xf]
  %v1326 = vld [vmem:[%s1314 + $0x2c] sm:$0xf]
  %v1327 = vld [vmem:[%s1314 + $0x30] sm:$0xf]
  %v1328 = vld [vmem:[%s1314 + $0x34] sm:$0xf]
  %v1329 = vld [vmem:[%s1314 + $0x38] sm:$0xf]
  %v1330 = vld [vmem:[%s1314 + $0x3c] sm:$0xf]
  %s1331 = scalar_lea.vmem %s5, 1
  %v1332 = vld [vmem:[%s1331] sm:$0x1]
  %v1334 = vlaneseq
  %v1335 = vshrl.u32 %v1334, 7
  %v1336 = vsub.s32 0, %v1335
  %v1337 = vrot.slane %v1332, %v1336
  %v1355 = vunpack.c.l.b16 %v1315
  %v1356 = vunpack.c.l.b16 %v1316
  %v1357 = vunpack.c.l.b16 %v1317
  %v1358 = vunpack.c.l.b16 %v1318
  %v1359 = vunpack.c.l.b16 %v1319
  %v1360 = vunpack.c.l.b16 %v1320
  %v1361 = vunpack.c.l.b16 %v1321
  %v1362 = vunpack.c.l.b16 %v1322
  %v1363 = vunpack.c.l.b16 %v1323
  %v1364 = vunpack.c.l.b16 %v1324
  %v1365 = vunpack.c.l.b16 %v1325
  %v1366 = vunpack.c.l.b16 %v1326
  %v1367 = vunpack.c.l.b16 %v1327
  %v1368 = vunpack.c.l.b16 %v1328
  %v1369 = vunpack.c.l.b16 %v1329
  %v1370 = vunpack.c.l.b16 %v1330
  %v1371 = vpack.c.b16 %v1356, %v1355
  %v1372 = vpack.c.b16 %v1358, %v1357
  %v1373 = vpack.c.b16 %v1360, %v1359
  %v1374 = vpack.c.b16 %v1362, %v1361
  %v1375 = vpack.c.b16 %v1364, %v1363
  %v1376 = vpack.c.b16 %v1366, %v1365
  %v1377 = vpack.c.b16 %v1368, %v1367
  %v1378 = vpack.c.b16 %v1370, %v1369
  %1387 = vmatprep.subr.bf16.mxu0 0
  %1388 = vmatpush1.bf16.msra.mxu0 %v1371
  %1389 = vmatprep.subr.bf16.mxu0 0
  %1390 = vmatpush1.bf16.msra.mxu0 %v1372
  %1391 = vmatprep.subr.bf16.mxu0 0
  %1392 = vmatpush1.bf16.msra.mxu0 %v1373
  %1393 = vmatprep.subr.bf16.mxu0 0
  %1394 = vmatpush1.bf16.msra.mxu0 %v1374
  %1395 = vmatprep.subr.bf16.mxu0 0
  %1396 = vmatpush1.bf16.msra.mxu0 %v1375
  %1397 = vmatprep.subr.bf16.mxu0 0
  %1398 = vmatpush1.bf16.msra.mxu0 %v1376
  %1399 = vmatprep.subr.bf16.mxu0 0
  %1400 = vmatpush1.bf16.msra.mxu0 %v1377
  %1401 = vmatprep.subr.bf16.mxu0 0
  %1402 = vmatpush1.bf16.msra.mxu0 %v1378
  %1403 = vmatprep.subr.bf16.mxu0 0
  %1404 = vmatpush1.bf16.msra.mxu0 0
  %1405 = vmatprep.subr.bf16.mxu0 0
  %1406 = vmatpush1.bf16.msra.mxu0 0
  %1407 = vmatprep.subr.bf16.mxu0 0
  %1408 = vmatpush1.bf16.msra.mxu0 0
  %1409 = vmatprep.subr.bf16.mxu0 0
  %1410 = vmatpush1.bf16.msra.mxu0 0
  %1411 = vmatprep.subr.bf16.mxu0 0
  %1412 = vmatpush1.bf16.msra.mxu0 0
  %1413 = vmatprep.subr.bf16.mxu0 0
  %1414 = vmatpush1.bf16.msra.mxu0 0
  %1415 = vmatprep.subr.bf16.mxu0 0
  %1416 = vmatpush1.bf16.msra.mxu0 0
  %1417 = vmatprep.subr.bf16.mxu0 0
  %1418 = vmatpush1.bf16.msra.mxu0 0
  %1419 = vmatprep.mubr.bf16.mxu0 0
  %1420 = vmatmul.mubr.bf16.gmra.mrb[0].mxu0 %v1313
  %v1421 = vpop.f32.mrb[0].mxu0
  %v1422 = vadd.f32 %v1337, %v1421
  %v1423 = vpop.f32.mrb[0].mxu0
  %v1424 = vpop.f32.mrb[0].mxu0
  %v1425 = vadd.f32 %v1337, %v1424
  %v1426 = vpop.f32.mrb[0].mxu0
  %1427 = vdwg.mxu0
  %v1428 = vmax.f32 %v1422, 0.0
  %v1429 = vmax.f32 %v1425, 0.0
  %v1430 = vpack.c.bf16 %v1429, %v1428
  %s1431 = scalar_lea.vmem %s6, 64
  %v1432 = vld [vmem:[%s1431] sm:$0xf]
  %v1433 = vld [vmem:[%s1431 + $0x4] sm:$0xf]
  %v1434 = vld [vmem:[%s1431 + $0x8] sm:$0xf]
  %v1435 = vld [vmem:[%s1431 + $0xc] sm:$0xf]
  %v1436 = vld [vmem:[%s1431 + $0x10] sm:$0xf]
  %v1437 = vld [vmem:[%s1431 + $0x14] sm:$0xf]
  %v1438 = vld [vmem:[%s1431 + $0x18] sm:$0xf]
  %v1439 = vld [vmem:[%s1431 + $0x1c] sm:$0xf]
  %v1440 = vld [vmem:[%s1431 + $0x20] sm:$0xf]
  %v1441 = vld [vmem:[%s1431 + $0x24] sm:$0xf]
  %v1442 = vld [vmem:[%s1431 + $0x28] sm:$0xf]
  %v1443 = vld [vmem:[%s1431 + $0x2c] sm:$0xf]
  %v1444 = vld [vmem:[%s1431 + $0x30] sm:$0xf]
  %v1445 = vld [vmem:[%s1431 + $0x34] sm:$0xf]
  %v1446 = vld [vmem:[%s1431 + $0x38] sm:$0xf]
  %v1447 = vld [vmem:[%s1431 + $0x3c] sm:$0xf]
  %s1448 = scalar_lea.vmem %s7, 1
  %v1449 = vld [vmem:[%s1448] sm:$0x1]
  %v1451 = vlaneseq
  %v1452 = vshrl.u32 %v1451, 7
  %v1453 = vsub.s32 0, %v1452
  %v1454 = vrot.slane %v1449, %v1453
  %v1472 = vunpack.c.l.b16 %v1432
  %v1473 = vunpack.c.l.b16 %v1433
  %v1474 = vunpack.c.l.b16 %v1434
  %v1475 = vunpack.c.l.b16 %v1435
  %v1476 = vunpack.c.l.b16 %v1436
  %v1477 = vunpack.c.l.b16 %v1437
  %v1478 = vunpack.c.l.b16 %v1438
  %v1479 = vunpack.c.l.b16 %v1439
  %v1480 = vunpack.c.l.b16 %v1440
  %v1481 = vunpack.c.l.b16 %v1441
  %v1482 = vunpack.c.l.b16 %v1442
  %v1483 = vunpack.c.l.b16 %v1443
  %v1484 = vunpack.c.l.b16 %v1444
  %v1485 = vunpack.c.l.b16 %v1445
  %v1486 = vunpack.c.l.b16 %v1446
  %v1487 = vunpack.c.l.b16 %v1447
  %v1488 = vpack.c.b16 %v1473, %v1472
  %v1489 = vpack.c.b16 %v1475, %v1474
  %v1490 = vpack.c.b16 %v1477, %v1476
  %v1491 = vpack.c.b16 %v1479, %v1478
  %v1492 = vpack.c.b16 %v1481, %v1480
  %v1493 = vpack.c.b16 %v1483, %v1482
  %v1494 = vpack.c.b16 %v1485, %v1484
  %v1495 = vpack.c.b16 %v1487, %v1486
  %1504 = vmatprep.subr.bf16.mxu0 0
  %1505 = vmatpush1.bf16.msra.mxu0 %v1488
  %1506 = vmatprep.subr.bf16.mxu0 0
  %1507 = vmatpush1.bf16.msra.mxu0 %v1489
  %1508 = vmatprep.subr.bf16.mxu0 0
  %1509 = vmatpush1.bf16.msra.mxu0 %v1490
  %1510 = vmatprep.subr.bf16.mxu0 0
  %1511 = vmatpush1.bf16.msra.mxu0 %v1491
  %1512 = vmatprep.subr.bf16.mxu0 0
  %1513 = vmatpush1.bf16.msra.mxu0 %v1492
  %1514 = vmatprep.subr.bf16.mxu0 0
  %1515 = vmatpush1.bf16.msra.mxu0 %v1493
  %1516 = vmatprep.subr.bf16.mxu0 0
  %1517 = vmatpush1.bf16.msra.mxu0 %v1494
  %1518 = vmatprep.subr.bf16.mxu0 0
  %1519 = vmatpush1.bf16.msra.mxu0 %v1495
  %1520 = vmatprep.subr.bf16.mxu0 0
  %1521 = vmatpush1.bf16.msra.mxu0 0
  %1522 = vmatprep.subr.bf16.mxu0 0
  %1523 = vmatpush1.bf16.msra.mxu0 0
  %1524 = vmatprep.subr.bf16.mxu0 0
  %1525 = vmatpush1.bf16.msra.mxu0 0
  %1526 = vmatprep.subr.bf16.mxu0 0
  %1527 = vmatpush1.bf16.msra.mxu0 0
  %1528 = vmatprep.subr.bf16.mxu0 0
  %1529 = vmatpush1.bf16.msra.mxu0 0
  %1530 = vmatprep.subr.bf16.mxu0 0
  %1531 = vmatpush1.bf16.msra.mxu0 0
  %1532 = vmatprep.subr.bf16.mxu0 0
  %1533 = vmatpush1.bf16.msra.mxu0 0
  %1534 = vmatprep.subr.bf16.mxu0 0
  %1535 = vmatpush1.bf16.msra.mxu0 0
  %1536 = vmatprep.mubr.bf16.mxu0 0
  %1537 = vmatmul.mubr.bf16.gmra.mrb[0].mxu0 %v1430
  %v1538 = vpop.f32.mrb[0].mxu0
  %v1539 = vadd.f32 %v1454, %v1538
  %v1540 = vpop.f32.mrb[0].mxu0
  %v1541 = vpop.f32.mrb[0].mxu0
  %v1542 = vadd.f32 %v1454, %v1541
  %v1543 = vpop.f32.mrb[0].mxu0
  %1544 = vdwg.mxu0
  %v1545 = vsel %vm329, %v1539, 0.0
  %v1546 = vsel %vm329, %v1542, 0.0
  %1547 = vrot.lane.b32.xlu0 %v1545, 32
  %v1548 = vpop.permute.xlu0 %1547
  %1549 = vrot.lane.b32.xlu0 %v1546, 32
  %v1550 = vpop.permute.xlu0 %1549
  %v1551 = vpack.c.bf16 %v1546, %v1545
  %v1552 = vpack.c.bf16 %v1550, %v1548
  %1553 = vmatprep.subr.bf16.mxu0 0
  %1554 = vmatpush1.bf16.msra.mxu0 %v1551
  %1555 = vmatprep.subr.bf16.mxu0 0
  %1556 = vmatpush1.bf16.msra.mxu0 %v1552
  %1557 = vmatprep.subr.bf16.mxu0 0
  %1558 = vmatpush1.bf16.msra.mxu0 0
  %1559 = vmatprep.subr.bf16.mxu0 0
  %1560 = vmatpush1.bf16.msra.mxu0 0
  %1561 = vmatprep.subr.bf16.mxu0 0
  %1562 = vmatpush1.bf16.msra.mxu0 0
  %1563 = vmatprep.subr.bf16.mxu0 0
  %1564 = vmatpush1.bf16.msra.mxu0 0
  %1565 = vmatprep.subr.bf16.mxu0 0
  %1566 = vmatpush1.bf16.msra.mxu0 0
  %1567 = vmatprep.subr.bf16.mxu0 0
  %1568 = vmatpush1.bf16.msra.mxu0 0
  %1569 = vmatprep.subr.bf16.mxu0 0
  %1570 = vmatpush1.bf16.msra.mxu0 0
  %1571 = vmatprep.subr.bf16.mxu0 0
  %1572 = vmatpush1.bf16.msra.mxu0 0
  %1573 = vmatprep.subr.bf16.mxu0 0
  %1574 = vmatpush1.bf16.msra.mxu0 0
  %1575 = vmatprep.subr.bf16.mxu0 0
  %1576 = vmatpush1.bf16.msra.mxu0 0
  %1577 = vmatprep.subr.bf16.mxu0 0
  %1578 = vmatpush1.bf16.msra.mxu0 0
  %1579 = vmatprep.subr.bf16.mxu0 0
  %1580 = vmatpush1.bf16.msra.mxu0 0
  %1581 = vmatprep.subr.bf16.mxu0 0
  %1582 = vmatpush1.bf16.msra.mxu0 0
  %1583 = vmatprep.subr.bf16.mxu0 0
  %1584 = vmatpush1.bf16.msra.mxu0 0
  %1585 = vmatprep.mubr.bf16.mxu0 0
  %1586 = vmatmul.mubr.bf16.gmra.mrb[0].mxu0 %v340
  %v1587 = vpop.f32.mrb[0].mxu0
  %v1588 = vadd.f32 0.0, %v1587
  %v1589 = vpop.f32.mrb[0].mxu0
  %v1590 = vpop.f32.mrb[0].mxu0
  %v1591 = vpop.f32.mrb[0].mxu0
  %1592 = vdwg.mxu0
  %v1593 = vpack.c.bf16 %v1588, %v1588
  %1594 = vmatprep.subr.bf16.mxu0 0
  %1595 = vmatpush1.bf16.msra.mxu0 %v440
  %1596 = vmatprep.subr.bf16.mxu0 0
  %1597 = vmatpush1.bf16.msra.mxu0 %v441
  %1598 = vmatprep.subr.bf16.mxu0 0
  %1599 = vmatpush1.bf16.msra.mxu0 %v442
  %1600 = vmatprep.subr.bf16.mxu0 0
  %1601 = vmatpush1.bf16.msra.mxu0 %v443
  %1602 = vmatprep.subr.bf16.mxu0 0
  %1603 = vmatpush1.bf16.msra.mxu0 %v444
  %1604 = vmatprep.subr.bf16.mxu0 0
  %1605 = vmatpush1.bf16.msra.mxu0 %v445
  %1606 = vmatprep.subr.bf16.mxu0 0
  %1607 = vmatpush1.bf16.msra.mxu0 %v446
  %1608 = vmatprep.subr.bf16.mxu0 0
  %1609 = vmatpush1.bf16.msra.mxu0 %v447
  %1610 = vmatprep.subr.bf16.mxu0 0
  %1611 = vmatpush1.bf16.msra.mxu0 0
  %1612 = vmatprep.subr.bf16.mxu0 0
  %1613 = vmatpush1.bf16.msra.mxu0 0
  %1614 = vmatprep.subr.bf16.mxu0 0
  %1615 = vmatpush1.bf16.msra.mxu0 0
  %1616 = vmatprep.subr.bf16.mxu0 0
  %1617 = vmatpush1.bf16.msra.mxu0 0
  %1618 = vmatprep.subr.bf16.mxu0 0
  %1619 = vmatpush1.bf16.msra.mxu0 0
  %1620 = vmatprep.subr.bf16.mxu0 0
  %1621 = vmatpush1.bf16.msra.mxu0 0
  %1622 = vmatprep.subr.bf16.mxu0 0
  %1623 = vmatpush1.bf16.msra.mxu0 0
  %1624 = vmatprep.subr.bf16.mxu0 0
  %1625 = vmatpush1.bf16.msra.mxu0 0
  %1626 = vmatprep.mubr.bf16.mxu0 0
  %1627 = vmatmul.mubr.bf16.gmra.mrb[0].mxu0 %v1593
  %v1628 = vpop.f32.mrb[0].mxu0
  %v1629 = vadd.f32 %v406, %v1628
  %v1630 = vpop.f32.mrb[0].mxu0
  %v1631 = vpop.f32.mrb[0].mxu0
  %v1632 = vpop.f32.mrb[0].mxu0
  %1633 = vdwg.mxu0
  %v1634 = vmax.f32 %v1629, 0.0
  %v1635 = vpack.c.bf16 %v1634, %v1634
  %1636 = vmatprep.subr.bf16.mxu0 0
  %1637 = vmatpush1.bf16.msra.mxu0 %v555
  %1638 = vmatprep.subr.bf16.mxu0 0
  %1639 = vmatpush1.bf16.msra.mxu0 %v556
  %1640 = vmatprep.subr.bf16.mxu0 0
  %1641 = vmatpush1.bf16.msra.mxu0 %v557
  %1642 = vmatprep.subr.bf16.mxu0 0
  %1643 = vmatpush1.bf16.msra.mxu0 %v558
  %1644 = vmatprep.subr.bf16.mxu0 0
  %1645 = vmatpush1.bf16.msra.mxu0 %v559
  %1646 = vmatprep.subr.bf16.mxu0 0
  %1647 = vmatpush1.bf16.msra.mxu0 %v560
  %1648 = vmatprep.subr.bf16.mxu0 0
  %1649 = vmatpush1.bf16.msra.mxu0 %v561
  %1650 = vmatprep.subr.bf16.mxu0 0
  %1651 = vmatpush1.bf16.msra.mxu0 %v562
  %1652 = vmatprep.subr.bf16.mxu0 0
  %1653 = vmatpush1.bf16.msra.mxu0 0
  %1654 = vmatprep.subr.bf16.mxu0 0
  %1655 = vmatpush1.bf16.msra.mxu0 0
  %1656 = vmatprep.subr.bf16.mxu0 0
  %1657 = vmatpush1.bf16.msra.mxu0 0
  %1658 = vmatprep.subr.bf16.mxu0 0
  %1659 = vmatpush1.bf16.msra.mxu0 0
  %1660 = vmatprep.subr.bf16.mxu0 0
  %1661 = vmatpush1.bf16.msra.mxu0 0
  %1662 = vmatprep.subr.bf16.mxu0 0
  %1663 = vmatpush1.bf16.msra.mxu0 0
  %1664 = vmatprep.subr.bf16.mxu0 0
  %1665 = vmatpush1.bf16.msra.mxu0 0
  %1666 = vmatprep.subr.bf16.mxu0 0
  %1667 = vmatpush1.bf16.msra.mxu0 0
  %1668 = vmatprep.mubr.bf16.mxu0 0
  %1669 = vmatmul.mubr.bf16.gmra.mrb[0].mxu0 %v1635
  %v1670 = vpop.f32.mrb[0].mxu0
  %v1671 = vadd.f32 %v521, %v1670
  %v1672 = vpop.f32.mrb[0].mxu0
  %v1673 = vpop.f32.mrb[0].mxu0
  %v1674 = vpop.f32.mrb[0].mxu0
  %1675 = vdwg.mxu0
  %v1676 = vsel %vm329, %v1671, 0.0
  %1677 = vrot.lane.b32.xlu0 %v1671, 96
  %v1678 = vpop.permute.xlu0 %1677
  %v1679 = vsel %vm329, %v1678, 0.0
  %v1680 = vpack.c.bf16 %v1679, %v1676
  %1681 = vmatprep.subr.bf16.mxu0 0
  %1682 = vmatpush1.bf16.msra.mxu0 %v1551
  %1683 = vmatprep.subr.bf16.mxu0 0
  %1684 = vmatpush1.bf16.msra.mxu0 %v1552
  %1685 = vmatprep.subr.bf16.mxu0 0
  %1686 = vmatpush1.bf16.msra.mxu0 0
  %1687 = vmatprep.subr.bf16.mxu0 0
  %1688 = vmatpush1.bf16.msra.mxu0 0
  %1689 = vmatprep.subr.bf16.mxu0 0
  %1690 = vmatpush1.bf16.msra.mxu0 0
  %1691 = vmatprep.subr.bf16.mxu0 0
  %1692 = vmatpush1.bf16.msra.mxu0 0
  %1693 = vmatprep.subr.bf16.mxu0 0
  %1694 = vmatpush1.bf16.msra.mxu0 0
  %1695 = vmatprep.subr.bf16.mxu0 0
  %1696 = vmatpush1.bf16.msra.mxu0 0
  %1697 = vmatprep.subr.bf16.mxu0 0
  %1698 = vmatpush1.bf16.msra.mxu0 0
  %1699 = vmatprep.subr.bf16.mxu0 0
  %1700 = vmatpush1.bf16.msra.mxu0 0
  %1701 = vmatprep.subr.bf16.mxu0 0
  %1702 = vmatpush1.bf16.msra.mxu0 0
  %1703 = vmatprep.subr.bf16.mxu0 0
  %1704 = vmatpush1.bf16.msra.mxu0 0
  %1705 = vmatprep.subr.bf16.mxu0 0
  %1706 = vmatpush1.bf16.msra.mxu0 0
  %1707 = vmatprep.subr.bf16.mxu0 0
  %1708 = vmatpush1.bf16.msra.mxu0 0
  %1709 = vmatprep.subr.bf16.mxu0 0
  %1710 = vmatpush1.bf16.msra.mxu0 0
  %1711 = vmatprep.subr.bf16.mxu0 0
  %1712 = vmatpush1.bf16.msra.mxu0 0
  %1713 = vmatprep.mubr.bf16.mxu0 0
  %1714 = vmatmul.mubr.bf16.gmra.mrb[0].mxu0 %v617
  %v1715 = vpop.f32.mrb[0].mxu0
  %v1716 = vadd.f32 0.0, %v1715
  %v1717 = vpop.f32.mrb[0].mxu0
  %v1718 = vpop.f32.mrb[0].mxu0
  %v1719 = vpop.f32.mrb[0].mxu0
  %1720 = vdwg.mxu0
  %v1721 = vpack.c.bf16 %v1716, %v1716
  %1722 = vmatprep.subr.bf16.mxu0 0
  %1723 = vmatpush1.bf16.msra.mxu0 %v717
  %1724 = vmatprep.subr.bf16.mxu0 0
  %1725 = vmatpush1.bf16.msra.mxu0 %v718
  %1726 = vmatprep.subr.bf16.mxu0 0
  %1727 = vmatpush1.bf16.msra.mxu0 %v719
  %1728 = vmatprep.subr.bf16.mxu0 0
  %1729 = vmatpush1.bf16.msra.mxu0 %v720
  %1730 = vmatprep.subr.bf16.mxu0 0
  %1731 = vmatpush1.bf16.msra.mxu0 %v721
  %1732 = vmatprep.subr.bf16.mxu0 0
  %1733 = vmatpush1.bf16.msra.mxu0 %v722
  %1734 = vmatprep.subr.bf16.mxu0 0
  %1735 = vmatpush1.bf16.msra.mxu0 %v723
  %1736 = vmatprep.subr.bf16.mxu0 0
  %1737 = vmatpush1.bf16.msra.mxu0 %v724
  %1738 = vmatprep.subr.bf16.mxu0 0
  %1739 = vmatpush1.bf16.msra.mxu0 0
  %1740 = vmatprep.subr.bf16.mxu0 0
  %1741 = vmatpush1.bf16.msra.mxu0 0
  %1742 = vmatprep.subr.bf16.mxu0 0
  %1743 = vmatpush1.bf16.msra.mxu0 0
  %1744 = vmatprep.subr.bf16.mxu0 0
  %1745 = vmatpush1.bf16.msra.mxu0 0
  %1746 = vmatprep.subr.bf16.mxu0 0
  %1747 = vmatpush1.bf16.msra.mxu0 0
  %1748 = vmatprep.subr.bf16.mxu0 0
  %1749 = vmatpush1.bf16.msra.mxu0 0
  %1750 = vmatprep.subr.bf16.mxu0 0
  %1751 = vmatpush1.bf16.msra.mxu0 0
  %1752 = vmatprep.subr.bf16.mxu0 0
  %1753 = vmatpush1.bf16.msra.mxu0 0
  %1754 = vmatprep.mubr.bf16.mxu0 0
  %1755 = vmatmul.mubr.bf16.gmra.mrb[0].mxu0 %v1721
  %v1756 = vpop.f32.mrb[0].mxu0
  %v1757 = vadd.f32 %v683, %v1756
  %v1758 = vpop.f32.mrb[0].mxu0
  %v1759 = vpop.f32.mrb[0].mxu0
  %v1760 = vpop.f32.mrb[0].mxu0
  %1761 = vdwg.mxu0
  %v1762 = vmax.f32 %v1757, 0.0
  %v1763 = vpack.c.bf16 %v1762, %v1762
  %1764 = vmatprep.subr.bf16.mxu0 0
  %1765 = vmatpush1.bf16.msra.mxu0 %v832
  %1766 = vmatprep.subr.bf16.mxu0 0
  %1767 = vmatpush1.bf16.msra.mxu0 %v833
  %1768 = vmatprep.subr.bf16.mxu0 0
  %1769 = vmatpush1.bf16.msra.mxu0 %v834
  %1770 = vmatprep.subr.bf16.mxu0 0
  %1771 = vmatpush1.bf16.msra.mxu0 %v835
  %1772 = vmatprep.subr.bf16.mxu0 0
  %1773 = vmatpush1.bf16.msra.mxu0 %v836
  %1774 = vmatprep.subr.bf16.mxu0 0
  %1775 = vmatpush1.bf16.msra.mxu0 %v837
  %1776 = vmatprep.subr.bf16.mxu0 0
  %1777 = vmatpush1.bf16.msra.mxu0 %v838
  %1778 = vmatprep.subr.bf16.mxu0 0
  %1779 = vmatpush1.bf16.msra.mxu0 %v839
  %1780 = vmatprep.subr.bf16.mxu0 0
  %1781 = vmatpush1.bf16.msra.mxu0 0
  %1782 = vmatprep.subr.bf16.mxu0 0
  %1783 = vmatpush1.bf16.msra.mxu0 0
  %1784 = vmatprep.subr.bf16.mxu0 0
  %1785 = vmatpush1.bf16.msra.mxu0 0
  %1786 = vmatprep.subr.bf16.mxu0 0
  %1787 = vmatpush1.bf16.msra.mxu0 0
  %1788 = vmatprep.subr.bf16.mxu0 0
  %1789 = vmatpush1.bf16.msra.mxu0 0
  %1790 = vmatprep.subr.bf16.mxu0 0
  %1791 = vmatpush1.bf16.msra.mxu0 0
  %1792 = vmatprep.subr.bf16.mxu0 0
  %1793 = vmatpush1.bf16.msra.mxu0 0
  %1794 = vmatprep.subr.bf16.mxu0 0
  %1795 = vmatpush1.bf16.msra.mxu0 0
  %1796 = vmatprep.mubr.bf16.mxu0 0
  %1797 = vmatmul.mubr.bf16.gmra.mrb[0].mxu0 %v1763
  %v1798 = vpop.f32.mrb[0].mxu0
  %v1799 = vadd.f32 %v798, %v1798
  %v1800 = vpop.f32.mrb[0].mxu0
  %v1801 = vpop.f32.mrb[0].mxu0
  %v1802 = vpop.f32.mrb[0].mxu0
  %1803 = vdwg.mxu0
  %v1804 = vsel %vm329, %v1799, 0.0
  %1805 = vrot.lane.b32.xlu0 %v1799, 96
  %v1806 = vpop.permute.xlu0 %1805
  %v1807 = vsel %vm329, %v1806, 0.0
  %v1808 = vpack.c.bf16 %v1807, %v1804
  %1809 = vmatprep.subr.bf16.mxu0 0
  %1810 = vmatpush1.bf16.msra.mxu0 %v1808
  %1811 = vmatprep.subr.bf16.mxu0 0
  %1812 = vmatpush1.bf16.msra.mxu0 0
  %1813 = vmatprep.subr.bf16.mxu0 0
  %1814 = vmatpush1.bf16.msra.mxu0 0
  %1815 = vmatprep.subr.bf16.mxu0 0
  %1816 = vmatpush1.bf16.msra.mxu0 0
  %1817 = vmatprep.subr.bf16.mxu0 0
  %1818 = vmatpush1.bf16.msra.mxu0 0
  %1819 = vmatprep.subr.bf16.mxu0 0
  %1820 = vmatpush1.bf16.msra.mxu0 0
  %1821 = vmatprep.subr.bf16.mxu0 0
  %1822 = vmatpush1.bf16.msra.mxu0 0
  %1823 = vmatprep.subr.bf16.mxu0 0
  %1824 = vmatpush1.bf16.msra.mxu0 0
  %1825 = vmatprep.subr.bf16.mxu0 0
  %1826 = vmatpush1.bf16.msra.mxu0 0
  %1827 = vmatprep.subr.bf16.mxu0 0
  %1828 = vmatpush1.bf16.msra.mxu0 0
  %1829 = vmatprep.subr.bf16.mxu0 0
  %1830 = vmatpush1.bf16.msra.mxu0 0
  %1831 = vmatprep.subr.bf16.mxu0 0
  %1832 = vmatpush1.bf16.msra.mxu0 0
  %1833 = vmatprep.subr.bf16.mxu0 0
  %1834 = vmatpush1.bf16.msra.mxu0 0
  %1835 = vmatprep.subr.bf16.mxu0 0
  %1836 = vmatpush1.bf16.msra.mxu0 0
  %1837 = vmatprep.subr.bf16.mxu0 0
  %1838 = vmatpush1.bf16.msra.mxu0 0
  %1839 = vmatprep.subr.bf16.mxu0 0
  %1840 = vmatpush1.bf16.msra.mxu0 0
  %1841 = vmatprep.mubr.bf16.mxu0 0
  %1842 = vmatmul.mubr.bf16.gmra.mrb[0].mxu0 %v895
  %v1843 = vpop.f32.mrb[0].mxu0
  %v1844 = vadd.f32 0.0, %v1843
  %v1845 = vpop.f32.mrb[0].mxu0
  %v1846 = vpop.f32.mrb[0].mxu0
  %v1847 = vadd.f32 0.0, %v1846
  %v1848 = vpop.f32.mrb[0].mxu0
  %1849 = vdwg.mxu0
  %1850 = vmatprep.subr.bf16.mxu0 0
  %1851 = vmatpush1.bf16.msra.mxu0 %v1680
  %1852 = vmatprep.subr.bf16.mxu0 0
  %1853 = vmatpush1.bf16.msra.mxu0 0
  %1854 = vmatprep.subr.bf16.mxu0 0
  %1855 = vmatpush1.bf16.msra.mxu0 0
  %1856 = vmatprep.subr.bf16.mxu0 0
  %1857 = vmatpush1.bf16.msra.mxu0 0
  %1858 = vmatprep.subr.bf16.mxu0 0
  %1859 = vmatpush1.bf16.msra.mxu0 0
  %1860 = vmatprep.subr.bf16.mxu0 0
  %1861 = vmatpush1.bf16.msra.mxu0 0
  %1862 = vmatprep.subr.bf16.mxu0 0
  %1863 = vmatpush1.bf16.msra.mxu0 0
  %1864 = vmatprep.subr.bf16.mxu0 0
  %1865 = vmatpush1.bf16.msra.mxu0 0
  %1866 = vmatprep.subr.bf16.mxu0 0
  %1867 = vmatpush1.bf16.msra.mxu0 0
  %1868 = vmatprep.subr.bf16.mxu0 0
  %1869 = vmatpush1.bf16.msra.mxu0 0
  %1870 = vmatprep.subr.bf16.mxu0 0
  %1871 = vmatpush1.bf16.msra.mxu0 0
  %1872 = vmatprep.subr.bf16.mxu0 0
  %1873 = vmatpush1.bf16.msra.mxu0 0
  %1874 = vmatprep.subr.bf16.mxu0 0
  %1875 = vmatpush1.bf16.msra.mxu0 0
  %1876 = vmatprep.subr.bf16.mxu0 0
  %1877 = vmatpush1.bf16.msra.mxu0 0
  %1878 = vmatprep.subr.bf16.mxu0 0
  %1879 = vmatpush1.bf16.msra.mxu0 0
  %1880 = vmatprep.subr.bf16.mxu0 0
  %1881 = vmatpush1.bf16.msra.mxu0 0
  %1882 = vmatprep.mubr.bf16.mxu0 0
  %1883 = vmatmul.mubr.bf16.gmra.mrb[0].mxu0 %v939
  %v1884 = vpop.f32.mrb[0].mxu0
  %v1885 = vadd.f32 %v1844, %v1884
  %v1886 = vpop.f32.mrb[0].mxu0
  %v1887 = vpop.f32.mrb[0].mxu0
  %v1888 = vadd.f32 %v1847, %v1887
  %v1889 = vpop.f32.mrb[0].mxu0
  %1890 = vdwg.mxu0
  %1891 = vmatprep.subr.bf16.mxu0 0
  %1892 = vmatpush1.bf16.msra.mxu0 %v1551
  %1893 = vmatprep.subr.bf16.mxu0 0
  %1894 = vmatpush1.bf16.msra.mxu0 %v1552
  %1895 = vmatprep.subr.bf16.mxu0 0
  %1896 = vmatpush1.bf16.msra.mxu0 0
  %1897 = vmatprep.subr.bf16.mxu0 0
  %1898 = vmatpush1.bf16.msra.mxu0 0
  %1899 = vmatprep.subr.bf16.mxu0 0
  %1900 = vmatpush1.bf16.msra.mxu0 0
  %1901 = vmatprep.subr.bf16.mxu0 0
  %1902 = vmatpush1.bf16.msra.mxu0 0
  %1903 = vmatprep.subr.bf16.mxu0 0
  %1904 = vmatpush1.bf16.msra.mxu0 0
  %1905 = vmatprep.subr.bf16.mxu0 0
  %1906 = vmatpush1.bf16.msra.mxu0 0
  %1907 = vmatprep.subr.bf16.mxu0 0
  %1908 = vmatpush1.bf16.msra.mxu0 0
  %1909 = vmatprep.subr.bf16.mxu0 0
  %1910 = vmatpush1.bf16.msra.mxu0 0
  %1911 = vmatprep.subr.bf16.mxu0 0
  %1912 = vmatpush1.bf16.msra.mxu0 0
  %1913 = vmatprep.subr.bf16.mxu0 0
  %1914 = vmatpush1.bf16.msra.mxu0 0
  %1915 = vmatprep.subr.bf16.mxu0 0
  %1916 = vmatpush1.bf16.msra.mxu0 0
  %1917 = vmatprep.subr.bf16.mxu0 0
  %1918 = vmatpush1.bf16.msra.mxu0 0
  %1919 = vmatprep.subr.bf16.mxu0 0
  %1920 = vmatpush1.bf16.msra.mxu0 0
  %1921 = vmatprep.subr.bf16.mxu0 0
  %1922 = vmatpush1.bf16.msra.mxu0 0
  %1923 = vmatprep.mubr.bf16.mxu0 0
  %1924 = vmatmul.mubr.bf16.gmra.mrb[0].mxu0 %v983
  %v1925 = vpop.f32.mrb[0].mxu0
  %v1926 = vadd.f32 0.0, %v1925
  %v1927 = vpop.f32.mrb[0].mxu0
  %v1928 = vpop.f32.mrb[0].mxu0
  %v1929 = vpop.f32.mrb[0].mxu0
  %1930 = vdwg.mxu0
  %v1931 = vpack.c.bf16 %v1926, %v1926
  %1932 = vmatprep.subr.bf16.mxu0 0
  %1933 = vmatpush1.bf16.msra.mxu0 %v1083
  %1934 = vmatprep.subr.bf16.mxu0 0
  %1935 = vmatpush1.bf16.msra.mxu0 %v1084
  %1936 = vmatprep.subr.bf16.mxu0 0
  %1937 = vmatpush1.bf16.msra.mxu0 %v1085
  %1938 = vmatprep.subr.bf16.mxu0 0
  %1939 = vmatpush1.bf16.msra.mxu0 %v1086
  %1940 = vmatprep.subr.bf16.mxu0 0
  %1941 = vmatpush1.bf16.msra.mxu0 %v1087
  %1942 = vmatprep.subr.bf16.mxu0 0
  %1943 = vmatpush1.bf16.msra.mxu0 %v1088
  %1944 = vmatprep.subr.bf16.mxu0 0
  %1945 = vmatpush1.bf16.msra.mxu0 %v1089
  %1946 = vmatprep.subr.bf16.mxu0 0
  %1947 = vmatpush1.bf16.msra.mxu0 %v1090
  %1948 = vmatprep.subr.bf16.mxu0 0
  %1949 = vmatpush1.bf16.msra.mxu0 0
  %1950 = vmatprep.subr.bf16.mxu0 0
  %1951 = vmatpush1.bf16.msra.mxu0 0
  %1952 = vmatprep.subr.bf16.mxu0 0
  %1953 = vmatpush1.bf16.msra.mxu0 0
  %1954 = vmatprep.subr.bf16.mxu0 0
  %1955 = vmatpush1.bf16.msra.mxu0 0
  %1956 = vmatprep.subr.bf16.mxu0 0
  %1957 = vmatpush1.bf16.msra.mxu0 0
  %1958 = vmatprep.subr.bf16.mxu0 0
  %1959 = vmatpush1.bf16.msra.mxu0 0
  %1960 = vmatprep.subr.bf16.mxu0 0
  %1961 = vmatpush1.bf16.msra.mxu0 0
  %1962 = vmatprep.subr.bf16.mxu0 0
  %1963 = vmatpush1.bf16.msra.mxu0 0
  %1964 = vmatprep.mubr.bf16.mxu0 0
  %1965 = vmatmul.mubr.bf16.gmra.mrb[0].mxu0 %v1931
  %v1966 = vpop.f32.mrb[0].mxu0
  %v1967 = vadd.f32 %v1049, %v1966
  %v1968 = vpop.f32.mrb[0].mxu0
  %v1969 = vpop.f32.mrb[0].mxu0
  %v1970 = vpop.f32.mrb[0].mxu0
  %1971 = vdwg.mxu0
  %v1972 = vmax.f32 %v1967, 0.0
  %v1973 = vpack.c.bf16 %v1972, %v1972
  %1974 = vmatprep.subr.bf16.mxu0 0
  %1975 = vmatpush1.bf16.msra.mxu0 %v1198
  %1976 = vmatprep.subr.bf16.mxu0 0
  %1977 = vmatpush1.bf16.msra.mxu0 %v1199
  %1978 = vmatprep.subr.bf16.mxu0 0
  %1979 = vmatpush1.bf16.msra.mxu0 %v1200
  %1980 = vmatprep.subr.bf16.mxu0 0
  %1981 = vmatpush1.bf16.msra.mxu0 %v1201
  %1982 = vmatprep.subr.bf16.mxu0 0
  %1983 = vmatpush1.bf16.msra.mxu0 %v1202
  %1984 = vmatprep.subr.bf16.mxu0 0
  %1985 = vmatpush1.bf16.msra.mxu0 %v1203
  %1986 = vmatprep.subr.bf16.mxu0 0
  %1987 = vmatpush1.bf16.msra.mxu0 %v1204
  %1988 = vmatprep.subr.bf16.mxu0 0
  %1989 = vmatpush1.bf16.msra.mxu0 %v1205
  %1990 = vmatprep.subr.bf16.mxu0 0
  %1991 = vmatpush1.bf16.msra.mxu0 0
  %1992 = vmatprep.subr.bf16.mxu0 0
  %1993 = vmatpush1.bf16.msra.mxu0 0
  %1994 = vmatprep.subr.bf16.mxu0 0
  %1995 = vmatpush1.bf16.msra.mxu0 0
  %1996 = vmatprep.subr.bf16.mxu0 0
  %1997 = vmatpush1.bf16.msra.mxu0 0
  %1998 = vmatprep.subr.bf16.mxu0 0
  %1999 = vmatpush1.bf16.msra.mxu0 0
  %2000 = vmatprep.subr.bf16.mxu0 0
  %2001 = vmatpush1.bf16.msra.mxu0 0
  %2002 = vmatprep.subr.bf16.mxu0 0
  %2003 = vmatpush1.bf16.msra.mxu0 0
  %2004 = vmatprep.subr.bf16.mxu0 0
  %2005 = vmatpush1.bf16.msra.mxu0 0
  %2006 = vmatprep.mubr.bf16.mxu0 0
  %2007 = vmatmul.mubr.bf16.gmra.mrb[0].mxu0 %v1973
  %v2008 = vpop.f32.mrb[0].mxu0
  %v2009 = vadd.f32 %v1164, %v2008
  %v2010 = vpop.f32.mrb[0].mxu0
  %v2011 = vpop.f32.mrb[0].mxu0
  %v2012 = vpop.f32.mrb[0].mxu0
  %2013 = vdwg.mxu0
  %v2014 = vsel %vm329, %v2009, 0.0
  %2015 = vrot.lane.b32.xlu0 %v2009, 96
  %v2016 = vpop.permute.xlu0 %2015
  %v2017 = vsel %vm329, %v2016, 0.0
  %v2018 = vpack.c.bf16 %v2017, %v2014
  %2019 = vmatprep.subr.bf16.mxu0 0
  %2020 = vmatpush1.bf16.msra.mxu0 %v2018
  %2021 = vmatprep.subr.bf16.mxu0 0
  %2022 = vmatpush1.bf16.msra.mxu0 0
  %2023 = vmatprep.subr.bf16.mxu0 0
  %2024 = vmatpush1.bf16.msra.mxu0 0
  %2025 = vmatprep.subr.bf16.mxu0 0
  %2026 = vmatpush1.bf16.msra.mxu0 0
  %2027 = vmatprep.subr.bf16.mxu0 0
  %2028 = vmatpush1.bf16.msra.mxu0 0
  %2029 = vmatprep.subr.bf16.mxu0 0
  %2030 = vmatpush1.bf16.msra.mxu0 0
  %2031 = vmatprep.subr.bf16.mxu0 0
  %2032 = vmatpush1.bf16.msra.mxu0 0
  %2033 = vmatprep.subr.bf16.mxu0 0
  %2034 = vmatpush1.bf16.msra.mxu0 0
  %2035 = vmatprep.subr.bf16.mxu0 0
  %2036 = vmatpush1.bf16.msra.mxu0 0
  %2037 = vmatprep.subr.bf16.mxu0 0
  %2038 = vmatpush1.bf16.msra.mxu0 0
  %2039 = vmatprep.subr.bf16.mxu0 0
  %2040 = vmatpush1.bf16.msra.mxu0 0
  %2041 = vmatprep.subr.bf16.mxu0 0
  %2042 = vmatpush1.bf16.msra.mxu0 0
  %2043 = vmatprep.subr.bf16.mxu0 0
  %2044 = vmatpush1.bf16.msra.mxu0 0
  %2045 = vmatprep.subr.bf16.mxu0 0
  %2046 = vmatpush1.bf16.msra.mxu0 0
  %2047 = vmatprep.subr.bf16.mxu0 0
  %2048 = vmatpush1.bf16.msra.mxu0 0
  %2049 = vmatprep.subr.bf16.mxu0 0
  %2050 = vmatpush1.bf16.msra.mxu0 0
  %2051 = vmatprep.mubr.bf16.mxu0 0
  %2052 = vmatmul.mubr.bf16.gmra.mrb[0].mxu0 %v1260
  %v2053 = vpop.f32.mrb[0].mxu0
  %v2054 = vadd.f32 0.0, %v2053
  %v2055 = vpop.f32.mrb[0].mxu0
  %v2056 = vpop.f32.mrb[0].mxu0
  %v2057 = vadd.f32 0.0, %v2056
  %v2058 = vpop.f32.mrb[0].mxu0
  %2059 = vdwg.mxu0
  %v2060 = vadd.f32 %v1885, %v2054
  %v2061 = vadd.f32 %v1888, %v2057
  %v2062 = vsel %vm329, %v2060, 0.0
  %v2063 = vsel %vm329, %v2061, 0.0
  %2064 = vrot.lane.b32.xlu0 %v2062, 32
  %v2065 = vpop.permute.xlu0 %2064
  %2066 = vrot.lane.b32.xlu0 %v2063, 32
  %v2067 = vpop.permute.xlu0 %2066
  %v2068 = vadd.f32 %v1545, %v2065
  %v2069 = vadd.f32 %v1546, %v2067
  %v2070 = vpack.c.bf16 %v2069, %v2068
  %2071 = vmatprep.subr.bf16.mxu0 0
  %2072 = vmatpush1.bf16.msra.mxu0 %v1371
  %2073 = vmatprep.subr.bf16.mxu0 0
  %2074 = vmatpush1.bf16.msra.mxu0 %v1372
  %2075 = vmatprep.subr.bf16.mxu0 0
  %2076 = vmatpush1.bf16.msra.mxu0 %v1373
  %2077 = vmatprep.subr.bf16.mxu0 0
  %2078 = vmatpush1.bf16.msra.mxu0 %v1374
  %2079 = vmatprep.subr.bf16.mxu0 0
  %2080 = vmatpush1.bf16.msra.mxu0 %v1375
  %2081 = vmatprep.subr.bf16.mxu0 0
  %2082 = vmatpush1.bf16.msra.mxu0 %v1376
  %2083 = vmatprep.subr.bf16.mxu0 0
  %2084 = vmatpush1.bf16.msra.mxu0 %v1377
  %2085 = vmatprep.subr.bf16.mxu0 0
  %2086 = vmatpush1.bf16.msra.mxu0 %v1378
  %2087 = vmatprep.subr.bf16.mxu0 0
  %2088 = vmatpush1.bf16.msra.mxu0 0
  %2089 = vmatprep.subr.bf16.mxu0 0
  %2090 = vmatpush1.bf16.msra.mxu0 0
  %2091 = vmatprep.subr.bf16.mxu0 0
  %2092 = vmatpush1.bf16.msra.mxu0 0
  %2093 = vmatprep.subr.bf16.mxu0 0
  %2094 = vmatpush1.bf16.msra.mxu0 0
  %2095 = vmatprep.subr.bf16.mxu0 0
  %2096 = vmatpush1.bf16.msra.mxu0 0
  %2097 = vmatprep.subr.bf16.mxu0 0
  %2098 = vmatpush1.bf16.msra.mxu0 0
  %2099 = vmatprep.subr.bf16.mxu0 0
  %2100 = vmatpush1.bf16.msra.mxu0 0
  %2101 = vmatprep.subr.bf16.mxu0 0
  %2102 = vmatpush1.bf16.msra.mxu0 0
  %2103 = vmatprep.mubr.bf16.mxu0 0
  %2104 = vmatmul.mubr.bf16.gmra.mrb[0].mxu0 %v2070
  %v2105 = vpop.f32.mrb[0].mxu0
  %v2106 = vadd.f32 %v1337, %v2105
  %v2107 = vpop.f32.mrb[0].mxu0
  %v2108 = vpop.f32.mrb[0].mxu0
  %v2109 = vadd.f32 %v1337, %v2108
  %v2110 = vpop.f32.mrb[0].mxu0
  %2111 = vdwg.mxu0
  %v2112 = vmax.f32 %v2106, 0.0
  %v2113 = vmax.f32 %v2109, 0.0
  %v2114 = vpack.c.bf16 %v2113, %v2112
  %2115 = vmatprep.subr.bf16.mxu0 0
  %2116 = vmatpush1.bf16.msra.mxu0 %v1488
  %2117 = vmatprep.subr.bf16.mxu0 0
  %2118 = vmatpush1.bf16.msra.mxu0 %v1489
  %2119 = vmatprep.subr.bf16.mxu0 0
  %2120 = vmatpush1.bf16.msra.mxu0 %v1490
  %2121 = vmatprep.subr.bf16.mxu0 0
  %2122 = vmatpush1.bf16.msra.mxu0 %v1491
  %2123 = vmatprep.subr.bf16.mxu0 0
  %2124 = vmatpush1.bf16.msra.mxu0 %v1492
  %2125 = vmatprep.subr.bf16.mxu0 0
  %2126 = vmatpush1.bf16.msra.mxu0 %v1493
  %2127 = vmatprep.subr.bf16.mxu0 0
  %2128 = vmatpush1.bf16.msra.mxu0 %v1494
  %2129 = vmatprep.subr.bf16.mxu0 0
  %2130 = vmatpush1.bf16.msra.mxu0 %v1495
  %2131 = vmatprep.subr.bf16.mxu0 0
  %2132 = vmatpush1.bf16.msra.mxu0 0
  %2133 = vmatprep.subr.bf16.mxu0 0
  %2134 = vmatpush1.bf16.msra.mxu0 0
  %2135 = vmatprep.subr.bf16.mxu0 0
  %2136 = vmatpush1.bf16.msra.mxu0 0
  %2137 = vmatprep.subr.bf16.mxu0 0
  %2138 = vmatpush1.bf16.msra.mxu0 0
  %2139 = vmatprep.subr.bf16.mxu0 0
  %2140 = vmatpush1.bf16.msra.mxu0 0
  %2141 = vmatprep.subr.bf16.mxu0 0
  %2142 = vmatpush1.bf16.msra.mxu0 0
  %2143 = vmatprep.subr.bf16.mxu0 0
  %2144 = vmatpush1.bf16.msra.mxu0 0
  %2145 = vmatprep.subr.bf16.mxu0 0
  %2146 = vmatpush1.bf16.msra.mxu0 0
  %2147 = vmatprep.mubr.bf16.mxu0 0
  %2148 = vmatmul.mubr.bf16.gmra.mrb[0].mxu0 %v2114
  %v2149 = vpop.f32.mrb[0].mxu0
  %v2150 = vadd.f32 %v1454, %v2149
  %v2151 = vpop.f32.mrb[0].mxu0
  %v2152 = vpop.f32.mrb[0].mxu0
  %v2153 = vadd.f32 %v1454, %v2152
  %v2154 = vpop.f32.mrb[0].mxu0
  %2155 = vdwg.mxu0
  %v2156 = vpack.c.bf16 %v2153, %v2150
  %v2158 = vsel %vm893, %v98, 0
  %2160 = vmatprep.subr.bf16.mxu0 0
  %2161 = vmatpush1.bf16.msra.mxu0 %v2156
  %2162 = vmatprep.subr.bf16.mxu0 0
  %2163 = vmatpush1.bf16.msra.mxu0 0
  %2164 = vmatprep.subr.bf16.mxu0 0
  %2165 = vmatpush1.bf16.msra.mxu0 0
  %2166 = vmatprep.subr.bf16.mxu0 0
  %2167 = vmatpush1.bf16.msra.mxu0 0
  %2168 = vmatprep.subr.bf16.mxu0 0
  %2169 = vmatpush1.bf16.msra.mxu0 0
  %2170 = vmatprep.subr.bf16.mxu0 0
  %2171 = vmatpush1.bf16.msra.mxu0 0
  %2172 = vmatprep.subr.bf16.mxu0 0
  %2173 = vmatpush1.bf16.msra.mxu0 0
  %2174 = vmatprep.subr.bf16.mxu0 0
  %2175 = vmatpush1.bf16.msra.mxu0 0
  %2176 = vmatprep.subr.bf16.mxu0 0
  %2177 = vmatpush1.bf16.msra.mxu0 0
  %2178 = vmatprep.subr.bf16.mxu0 0
  %2179 = vmatpush1.bf16.msra.mxu0 0
  %2180 = vmatprep.subr.bf16.mxu0 0
  %2181 = vmatpush1.bf16.msra.mxu0 0
  %2182 = vmatprep.subr.bf16.mxu0 0
  %2183 = vmatpush1.bf16.msra.mxu0 0
  %2184 = vmatprep.subr.bf16.mxu0 0
  %2185 = vmatpush1.bf16.msra.mxu0 0
  %2186 = vmatprep.subr.bf16.mxu0 0
  %2187 = vmatpush1.bf16.msra.mxu0 0
  %2188 = vmatprep.subr.bf16.mxu0 0
  %2189 = vmatpush1.bf16.msra.mxu0 0
  %2190 = vmatprep.subr.bf16.mxu0 0
  %2191 = vmatpush1.bf16.msra.mxu0 0
  %2192 = vmatprep.mubr.bf16.mxu0 0
  %2193 = vmatmul.mubr.bf16.gmra.mrb[0].mxu0 %v2158
  %v2194 = vpop.f32.mrb[0].mxu0
  %v2195 = vadd.f32 0.0, %v2194
  %v2196 = vpop.f32.mrb[0].mxu0
  %v2197 = vpop.f32.mrb[0].mxu0
  %v2198 = vpop.f32.mrb[0].mxu0
  %2199 = vdwg.mxu0
  %2200 = vst [vmem:[%s8] sm:$0xff] %v2195
  // Predicated region
  $region34: #{hetero_gnn_forward.1} parent=0 // pred_check
    _
  $region35: #{hetero_gnn_forward.1} parent=0 // pred_check_branch
    %2202 = sbr.rel (0) target = $region37
  $region36: #{hetero_gnn_forward.1} parent=0 // pred_region
    _
  $region37: #{hetero_gnn_forward.1} parent=0 // pred_fallthru
    _
  // Predicated region
  $region38: #{hetero_gnn_forward.1} parent=0 // pred_check
    _
  $region39: #{hetero_gnn_forward.1} parent=0 // pred_check_branch
    %2204 = sbr.rel (0) target = $region41
  $region40: #{hetero_gnn_forward.1} parent=0 // pred_region
    _
  $region41: #{hetero_gnn_forward.1} parent=0 // pred_fallthru
    _

</llo_original>
